<compile_context>
chip_gen: v5e
topology: v5e:2x2
jax: 0.10.0
libtpu: 0.0.40
codegen_flags: <defaults>
</compile_context>

<pallas_src>
import jax
import jax.numpy as jnp
from jax.experimental import pallas as pl
from jax.experimental.pallas import tpu as pltpu

EPS = 1e-5          # nn.BatchNorm2d default eps
SLOPE = 0.2         # LeakyReLU negative slope

_VMEM_LIMIT = 32 * 1024 * 1024     # scoped VMEM limit (safe on v5e/v6e/v7x)
_TILE_BUDGET = 20 * 1024 * 1024    # per-call working-set budget for tiling


# ---------------------------------------------------------------------------
# Tiling helpers
# ---------------------------------------------------------------------------
def _pick_oc_tile(oc):
    if oc <= 256:
        return oc
    for t in (256, 128, 64, 32, 16, 8):
        if oc % t == 0:
            return t
    return oc


def _pick_m_tile(m_pad, per_m_bytes, fixed_bytes, budget=_TILE_BUDGET):
    for mt in (2048, 1024, 512, 256, 128):
        if m_pad % mt == 0 and fixed_bytes + per_m_bytes * mt <= budget:
            return mt
    return 128


# ---------------------------------------------------------------------------
# Kernel 1: conv-as-matmul + per-channel sum / sum-of-squares (single pass)
# ---------------------------------------------------------------------------
def _conv_stats_kernel(w_ref, p_ref, y_ref, sum_ref, ssq_ref):
    m_idx = pl.program_id(1)

    @pl.when(m_idx == 0)
    def _init():
        sum_ref[...] = jnp.zeros_like(sum_ref)
        ssq_ref[...] = jnp.zeros_like(ssq_ref)

    # bf16 MXU operands -> f32 accumulator; y is [oc_tile, m_tile] lane-dense.
    y = jnp.dot(w_ref[...], p_ref[...], preferred_element_type=jnp.float32)
    y_ref[...] = y.astype(y_ref.dtype)
    # Parked [oc_tile, 1] output accumulators (resident across the m axis).
    sum_ref[...] += jnp.sum(y, axis=1, keepdims=True)
    ssq_ref[...] += jnp.sum(y * y, axis=1, keepdims=True)


def conv_stats(patches_t, wmat):
    """Single-pass conv: returns (y_bf16 [OC, M_pad], sum [OC,1], ssq [OC,1]).

    patches_t : [K, M_pad] bf16 (M padded to a multiple of 128 with zero
                columns; zero columns give y == 0 exactly, so they do not
                perturb the BN statistics).
    wmat      : [OC, K] f32 (PyTorch OIHW weight reshaped row-major).
    """
    K, M_pad = patches_t.shape
    OC = wmat.shape[0]
    assert wmat.shape == (OC, K)
    assert M_pad % 128 == 0
    assert patches_t.dtype == jnp.bfloat16

    oc_tile = _pick_oc_tile(OC)
    # VMEM estimate per m-column: double-buffered patch tile + double-buffered
    # bf16 y tile + f32 matmul temp; fixed: parked weight tile.
    per_m = 2 * (K * 2) + 2 * (oc_tile * 2) + oc_tile * 4
    fixed = 2 * (oc_tile * K * 2)
    m_tile = _pick_m_tile(M_pad, per_m, fixed)
    grid = (OC // oc_tile, M_pad // m_tile)

    w_bf16 = wmat.astype(jnp.bfloat16)

    cost = pl.CostEstimate(
        flops=2 * OC * K * M_pad,
        transcendentals=0,
        bytes_accessed=K * M_pad * 2 + OC * K * 2 + OC * M_pad * 2 + OC * 8,
    )

    return pl.pallas_call(
        _conv_stats_kernel,
        out_shape=(
            jax.ShapeDtypeStruct((OC, M_pad), jnp.bfloat16),   # raw pre-BN y
            jax.ShapeDtypeStruct((OC, 1), jnp.float32),        # sum
            jax.ShapeDtypeStruct((OC, 1), jnp.float32),        # sum of squares
        ),
        grid=grid,
        in_specs=[
            pl.BlockSpec((oc_tile, K), lambda oc, m: (oc, 0)),
            pl.BlockSpec((K, m_tile), lambda oc, m: (0, m)),
        ],
        out_specs=(
            pl.BlockSpec((oc_tile, m_tile), lambda oc, m: (oc, m)),
            pl.BlockSpec((oc_tile, 1), lambda oc, m: (oc, 0)),
            pl.BlockSpec((oc_tile, 1), lambda oc, m: (oc, 0)),
        ),
        compiler_params=pltpu.CompilerParams(
            dimension_semantics=("parallel", "arbitrary"),
            vmem_limit_bytes=_VMEM_LIMIT),
        cost_estimate=cost,
    )(w_bf16, patches_t)


# ---------------------------------------------------------------------------
# Kernel 2: epilogue — BN affine (train stats) [+ residual-branch BN] [+ act]
# ---------------------------------------------------------------------------
def _make_bn_act_kernel(m_real, apply_act, has_residual):
    inv_m = 1.0 / float(m_real)

    def bn(y_ref, s_ref, q_ref, g_ref, b_ref):
        mean = s_ref[...] * inv_m                        # [oc_tile, 1]
        # TODO(synk): switch to shifted sums if |mean| >> std becomes possible.
        var = q_ref[...] * inv_m - mean * mean
        scale = g_ref[...] * jax.lax.rsqrt(var + EPS)    # folded BN affine
        shift = b_ref[...] - mean * scale
        return y_ref[...].astype(jnp.float32) * scale + shift

    def kernel(*refs):
        if has_residual:
            (y_ref, s_ref, q_ref, g_ref, b_ref,
             yr_ref, sr_ref, qr_ref, gr_ref, br_ref, o_ref) = refs
        else:
            y_ref, s_ref, q_ref, g_ref, b_ref, o_ref = refs
        out = bn(y_ref, s_ref, q_ref, g_ref, b_ref)
        if has_residual:
            out = out + bn(yr_ref, sr_ref, qr_ref, gr_ref, br_ref)
        if apply_act:
            out = jnp.where(out >= 0.0, out, SLOPE * out)
        o_ref[...] = out.astype(o_ref.dtype)

    return kernel


def bn_act(y, ssum, ssq, gamma, beta, m_real, *, apply_act,
           residual=None, out_dtype=jnp.float32):
    """out = BN(y) [+ BN(y_res)] [LeakyReLU];  residual = (y, sum, ssq, g, b)."""
    OC, M_pad = y.shape
    oc_tile = _pick_oc_tile(OC)
    out_bytes = jnp.dtype(out_dtype).itemsize
    n_y = 2 if residual is not None else 1
    per_m = 2 * (oc_tile * 2) * n_y + 2 * oc_tile * out_bytes
    m_tile = _pick_m_tile(M_pad, per_m, 0)
    grid = (OC // oc_tile, M_pad // m_tile)

    ym_spec = pl.BlockSpec((oc_tile, m_tile), lambda oc, m: (oc, m))
    vec_spec = pl.BlockSpec((oc_tile, 1), lambda oc, m: (oc, 0))

    args = [y, ssum, ssq,
            gamma.reshape(OC, 1).astype(jnp.float32),
            beta.reshape(OC, 1).astype(jnp.float32)]
    in_specs = [ym_spec, vec_spec, vec_spec, vec_spec, vec_spec]
    if residual is not None:
        yr, sr, qr, gr, br = residual
        assert yr.shape == (OC, M_pad)
        args += [yr, sr, qr,
                 gr.reshape(OC, 1).astype(jnp.float32),
                 br.reshape(OC, 1).astype(jnp.float32)]
        in_specs += [ym_spec, vec_spec, vec_spec, vec_spec, vec_spec]

    kernel = _make_bn_act_kernel(m_real, apply_act, residual is not None)
    cost = pl.CostEstimate(
        flops=(9 if residual is not None else 4) * OC * M_pad,
        transcendentals=OC * (M_pad // m_tile) * n_y,
        bytes_accessed=OC * M_pad * 2 * n_y + OC * M_pad * out_bytes,
    )

    return pl.pallas_call(
        kernel,
        out_shape=jax.ShapeDtypeStruct((OC, M_pad), out_dtype),
        grid=grid,
        in_specs=in_specs,
        out_specs=ym_spec,
        compiler_params=pltpu.CompilerParams(
            dimension_semantics=("parallel", "parallel"),
            vmem_limit_bytes=_VMEM_LIMIT),
        cost_estimate=cost,
    )(*args)


# ---------------------------------------------------------------------------
# JAX glue: channel-major bf16 im2col + parameter setup + forward
# ---------------------------------------------------------------------------
def im2col_t(x_cnhw, k, s, p):
    """[C, N, H, W] (bf16) -> patches^T [C*k*k, N*OH*OW] (row = c*k*k+kh*k+kw),
    with the M axis zero-padded up to a multiple of 128."""
    C, N, H, W = x_cnhw.shape
    xp = jnp.pad(x_cnhw, ((0, 0), (0, 0), (p, p), (p, p)))
    OH = (H + 2 * p - k) // s + 1
    OW = (W + 2 * p - k) // s + 1
    taps = []
    for kh in range(k):
        for kw in range(k):
            taps.append(xp[:, :, kh:kh + s * OH:s, kw:kw + s * OW:s])
    pat = jnp.stack(taps, axis=1)               # [C, k*k, N, OH, OW]
    M = N * OH * OW
    pat = pat.reshape(C * k * k, M)             # [K, M], already bf16
    M_pad = -(-M // 128) * 128
    if M_pad != M:
        pat = jnp.pad(pat, ((0, 0), (0, M_pad - M)))
    return pat, OH, OW, M


def init_params(key, inplanes):
    C = inplanes
    ks = jax.random.split(key, 9)
    return {
        # conv weights, PyTorch layout [OC, IC, KH, KW], bias=False
        "w1":   0.1 * jax.random.normal(ks[0], (2 * C, C, 4, 4), jnp.float32),
        "w2":   0.1 * jax.random.normal(ks[1], (4 * C, 2 * C, 4, 4), jnp.float32),
        "w_ds": 0.1 * jax.random.normal(ks[2], (4 * C, C, 4, 4), jnp.float32),
        # BatchNorm affine params (gamma, beta) per output channel
        "g1":   1.0 + 0.1 * jax.random.normal(ks[3], (2 * C,), jnp.float32),
        "b1":   0.1 * jax.random.normal(ks[4], (2 * C,), jnp.float32),
        "g2":   1.0 + 0.1 * jax.random.normal(ks[5], (4 * C,), jnp.float32),
        "b2":   0.1 * jax.random.normal(ks[6], (4 * C,), jnp.float32),
        "g_ds": 1.0 + 0.1 * jax.random.normal(ks[7], (4 * C,), jnp.float32),
        "b_ds": 0.1 * jax.random.normal(ks[8], (4 * C,), jnp.float32),
    }


def res_block_forward(x, params):
    N, C, H, W = x.shape
    # Channel-major + bf16 once at the boundary (im2col then emits bf16).
    x_c = x.transpose(1, 0, 2, 3).astype(jnp.bfloat16)   # [C, N, H, W]

    # downsample: Conv2d(C, 4C, k=4, s=4, p=0)  -> raw y + stats (BN folded
    # into block2's epilogue below, so the residual is never re-normalized).
    pd, OHd, OWd, Md = im2col_t(x_c, 4, 4, 0)
    y_ds, s_ds, q_ds = conv_stats(pd, params["w_ds"].reshape(4 * C, C * 16))

    # block1: Conv2d(C, 2C, k=4, s=2, p=1) + BN + LeakyReLU(0.2)  (bf16 out)
    p1, OH1, OW1, M1 = im2col_t(x_c, 4, 2, 1)
    y1, s1, q1 = conv_stats(p1, params["w1"].reshape(2 * C, C * 16))
    out1 = bn_act(y1, s1, q1, params["g1"], params["b1"], M1,
                  apply_act=True, out_dtype=jnp.bfloat16)
    out1_c = out1[:, :M1].reshape(2 * C, N, OH1, OW1)    # still channel-major

    # block2: Conv2d(2C, 4C, k=4, s=2, p=1) + BN, += BN(downsample), LeakyReLU
    p2, OH2, OW2, M2 = im2col_t(out1_c, 4, 2, 1)
    assert M2 == Md and p2.shape[1] == y_ds.shape[1]     # same padded layout
    y2, s2, q2 = conv_stats(p2, params["w2"].reshape(4 * C, 2 * C * 16))
    out = bn_act(y2, s2, q2, params["g2"], params["b2"], M2,
                 apply_act=True,
                 residual=(y_ds, s_ds, q_ds, params["g_ds"], params["b_ds"]),
                 out_dtype=jnp.float32)

    out = out[:, :M2].reshape(4 * C, N, OH2, OW2)
    return out.transpose(1, 0, 2, 3)                     # back to NCHW, f32


# Pure-JAX f32 reference (mirrors the PyTorch forward in training mode)
def reference_forward(x, params):
    def conv(x_, w, stride, pad):
        return jax.lax.conv_general_dilated(
            x_, w, (stride, stride), [(pad, pad), (pad, pad)],
            dimension_numbers=("NCHW", "OIHW", "NCHW"))

    def bn(y, g, b):
        mean = y.mean(axis=(0, 2, 3), keepdims=True)
        var = jnp.square(y - mean).mean(axis=(0, 2, 3), keepdims=True)
        return ((y - mean) * jax.lax.rsqrt(var + EPS)
                * g.reshape(1, -1, 1, 1) + b.reshape(1, -1, 1, 1))

    def lrelu(y):
        return jnp.where(y >= 0, y, SLOPE * y)

    residual = bn(conv(x, params["w_ds"], 4, 0), params["g_ds"], params["b_ds"])
    out = lrelu(bn(conv(x, params["w1"], 2, 1), params["g1"], params["b1"]))
    out = bn(conv(out, params["w2"], 2, 1), params["g2"], params["b2"])
    return lrelu(out + residual)


if __name__ == "__main__":
    key = jax.random.PRNGKey(0)
    k_x, k_p = jax.random.split(key)

    N, C, H, W = 2, 4, 16, 16                     # small NCHW input
    x = jax.random.normal(k_x, (N, C, H, W), jnp.float32)
    params = init_params(k_p, C)

    fwd = jax.jit(res_block_forward)
    out = jax.block_until_ready(fwd(x, params))
    ref = jax.block_until_ready(reference_forward(x, params))

    assert out.shape == (N, 4 * C, H // 4, W // 4), out.shape
    max_err = float(jnp.max(jnp.abs(out - ref)))
    # bf16 patches / weights / pre-BN intermediates -> looser than pure f32.
    assert jnp.allclose(out, ref, atol=3e-2, rtol=3e-2), max_err

    print("KERNEL_OK")
</pallas_src>

<mosaic_0001>
module attributes {stable_mosaic.version = 11 : i64} {
  func.func @_conv_stats_kernel(%arg0: i32, %arg1: i32, %arg2: memref<8x64xbf16, #tpu.memory_space<vmem>>, %arg3: memref<64x128xbf16, #tpu.memory_space<vmem>>, %arg4: memref<8x128xbf16, #tpu.memory_space<vmem>>, %arg5: memref<8x1xf32, #tpu.memory_space<vmem>>, %arg6: memref<8x1xf32, #tpu.memory_space<vmem>>) attributes {dimension_semantics = [#tpu.dimension_semantics<parallel>, #tpu.dimension_semantics<arbitrary>], iteration_bounds = array<i64: 1, 1>, scalar_prefetch = 0 : i64, scratch_operands = 0 : i64, tpu.core_type = #tpu.core_type<tc>, window_params = [{transform_indices = @transform_0, window_bounds = array<i64: 8, 64>}, {transform_indices = @transform_1, window_bounds = array<i64: 64, 128>}, {transform_indices = @transform_2, window_bounds = array<i64: 8, 128>}, {transform_indices = @transform_3, window_bounds = array<i64: 8, 1>}, {transform_indices = @transform_4, window_bounds = array<i64: 8, 1>}]} {
    %c0_i32 = arith.constant 0 : i32
    %0 = arith.cmpi eq, %arg1, %c0_i32 : i32
    %1 = arith.extui %0 : i1 to i32
    %c0_i32_0 = arith.constant 0 : i32
    %2 = arith.cmpi ne, %1, %c0_i32_0 : i32
    scf.if %2 {
      %cst_16 = arith.constant 0.000000e+00 : f32
      %19 = vector.broadcast %cst_16 : f32 to vector<8x1xf32>
      %c0_17 = arith.constant 0 : index
      %c0_18 = arith.constant 0 : index
      %20 = vector.load %arg5[%c0_17, %c0_18] : memref<8x1xf32, #tpu.memory_space<vmem>>, vector<8x1xf32>
      tpu.vector_store %arg5[%c0_17, %c0_18], %19 {strides = array<i32>} : memref<8x1xf32, #tpu.memory_space<vmem>>, vector<8x1xf32>,
      %cst_19 = arith.constant 0.000000e+00 : f32
      %21 = vector.broadcast %cst_19 : f32 to vector<8x1xf32>
      %c0_20 = arith.constant 0 : index
      %c0_21 = arith.constant 0 : index
      %22 = vector.load %arg6[%c0_20, %c0_21] : memref<8x1xf32, #tpu.memory_space<vmem>>, vector<8x1xf32>
      tpu.vector_store %arg6[%c0_20, %c0_21], %21 {strides = array<i32>} : memref<8x1xf32, #tpu.memory_space<vmem>>, vector<8x1xf32>,
    } else {
    }
    %c0 = arith.constant 0 : index
    %c0_1 = arith.constant 0 : index
    %3 = vector.load %arg2[%c0, %c0_1] : memref<8x64xbf16, #tpu.memory_space<vmem>>, vector<8x64xbf16>
    %c0_2 = arith.constant 0 : index
    %c0_3 = arith.constant 0 : index
    %4 = vector.load %arg3[%c0_2, %c0_3] : memref<64x128xbf16, #tpu.memory_space<vmem>>, vector<64x128xbf16>
    %cst = arith.constant dense<0.000000e+00> : vector<8x128xf32>
    %5 = tpu.matmul %3, %4, %cst {dimension_numbers = #tpu.dot_dimension_numbers<[1], [0], [0], [1], [0, 0, 1, 1], [], []>} : vector<8x64xbf16>, vector<64x128xbf16>, vector<8x128xf32> -> vector<8x128xf32>
    %6 = arith.truncf %5 : vector<8x128xf32> to vector<8x128xbf16>
    %c0_4 = arith.constant 0 : index
    %c0_5 = arith.constant 0 : index
    %7 = vector.load %arg4[%c0_4, %c0_5] : memref<8x128xbf16, #tpu.memory_space<vmem>>, vector<8x128xbf16>
    tpu.vector_store %arg4[%c0_4, %c0_5], %6 {strides = array<i32>} : memref<8x128xbf16, #tpu.memory_space<vmem>>, vector<8x128xbf16>,
    %c0_6 = arith.constant 0 : index
    %c0_7 = arith.constant 0 : index
    %8 = vector.load %arg5[%c0_6, %c0_7] : memref<8x1xf32, #tpu.memory_space<vmem>>, vector<8x1xf32>
    %cst_8 = arith.constant dense<0.000000e+00> : vector<8xf32>
    %9 = vector.multi_reduction <add>, %5, %cst_8 [1] : vector<8x128xf32> to vector<8xf32>
    %10 = vector.shape_cast %9 : vector<8xf32> to vector<8x1xf32>
    %11 = arith.addf %8, %10 : vector<8x1xf32>
    %c0_9 = arith.constant 0 : index
    %c0_10 = arith.constant 0 : index
    %12 = vector.load %arg5[%c0_9, %c0_10] : memref<8x1xf32, #tpu.memory_space<vmem>>, vector<8x1xf32>
    tpu.vector_store %arg5[%c0_9, %c0_10], %11 {strides = array<i32>} : memref<8x1xf32, #tpu.memory_space<vmem>>, vector<8x1xf32>,
    %c0_11 = arith.constant 0 : index
    %c0_12 = arith.constant 0 : index
    %13 = vector.load %arg6[%c0_11, %c0_12] : memref<8x1xf32, #tpu.memory_space<vmem>>, vector<8x1xf32>
    %14 = arith.mulf %5, %5 : vector<8x128xf32>
    %cst_13 = arith.constant dense<0.000000e+00> : vector<8xf32>
    %15 = vector.multi_reduction <add>, %14, %cst_13 [1] : vector<8x128xf32> to vector<8xf32>
    %16 = vector.shape_cast %15 : vector<8xf32> to vector<8x1xf32>
    %17 = arith.addf %13, %16 : vector<8x1xf32>
    %c0_14 = arith.constant 0 : index
    %c0_15 = arith.constant 0 : index
    %18 = vector.load %arg6[%c0_14, %c0_15] : memref<8x1xf32, #tpu.memory_space<vmem>>, vector<8x1xf32>
    tpu.vector_store %arg6[%c0_14, %c0_15], %17 {strides = array<i32>} : memref<8x1xf32, #tpu.memory_space<vmem>>, vector<8x1xf32>,
    return
  }
  func.func @transform_0(%arg0: i32, %arg1: i32) -> (i32, i32) {
    %c0_i32 = arith.constant 0 : i32
    %c0_i32_0 = arith.constant 0 : i32
    return %arg0, %c0_i32 : i32, i32
  }
  func.func @transform_1(%arg0: i32, %arg1: i32) -> (i32, i32) {
    %c0_i32 = arith.constant 0 : i32
    %c0_i32_0 = arith.constant 0 : i32
    return %c0_i32, %arg1 : i32, i32
  }
  func.func @transform_2(%arg0: i32, %arg1: i32) -> (i32, i32) {
    %c0_i32 = arith.constant 0 : i32
    return %arg0, %arg1 : i32, i32
  }
  func.func @transform_3(%arg0: i32, %arg1: i32) -> (i32, i32) {
    %c0_i32 = arith.constant 0 : i32
    %c0_i32_0 = arith.constant 0 : i32
    return %arg0, %c0_i32 : i32, i32
  }
  func.func @transform_4(%arg0: i32, %arg1: i32) -> (i32, i32) {
    %c0_i32 = arith.constant 0 : i32
    %c0_i32_0 = arith.constant 0 : i32
    return %arg0, %c0_i32 : i32, i32
  }
}

module attributes {stable_mosaic.version = 11 : i64} {
  func.func @kernel(%arg0: i32, %arg1: i32, %arg2: memref<8x128xbf16, #tpu.memory_space<vmem>>, %arg3: memref<8x1xf32, #tpu.memory_space<vmem>>, %arg4: memref<8x1xf32, #tpu.memory_space<vmem>>, %arg5: memref<8x1xf32, #tpu.memory_space<vmem>>, %arg6: memref<8x1xf32, #tpu.memory_space<vmem>>, %arg7: memref<8x128xbf16, #tpu.memory_space<vmem>>) attributes {dimension_semantics = [#tpu.dimension_semantics<parallel>, #tpu.dimension_semantics<parallel>], iteration_bounds = array<i64: 1, 1>, scalar_prefetch = 0 : i64, scratch_operands = 0 : i64, tpu.core_type = #tpu.core_type<tc>, window_params = [{transform_indices = @transform_0, window_bounds = array<i64: 8, 128>}, {transform_indices = @transform_1, window_bounds = array<i64: 8, 1>}, {transform_indices = @transform_2, window_bounds = array<i64: 8, 1>}, {transform_indices = @transform_3, window_bounds = array<i64: 8, 1>}, {transform_indices = @transform_4, window_bounds = array<i64: 8, 1>}, {transform_indices = @transform_5, window_bounds = array<i64: 8, 128>}]} {
    %c0 = arith.constant 0 : index
    %c0_0 = arith.constant 0 : index
    %0 = vector.load %arg3[%c0, %c0_0] : memref<8x1xf32, #tpu.memory_space<vmem>>, vector<8x1xf32>
    %cst = arith.constant 7.812500e-03 : f32
    %1 = vector.broadcast %cst : f32 to vector<8x1xf32>
    %2 = arith.mulf %0, %1 : vector<8x1xf32>
    %c0_1 = arith.constant 0 : index
    %c0_2 = arith.constant 0 : index
    %3 = vector.load %arg4[%c0_1, %c0_2] : memref<8x1xf32, #tpu.memory_space<vmem>>, vector<8x1xf32>
    %cst_3 = arith.constant 7.812500e-03 : f32
    %4 = vector.broadcast %cst_3 : f32 to vector<8x1xf32>
    %5 = arith.mulf %3, %4 : vector<8x1xf32>
    %6 = arith.mulf %2, %2 : vector<8x1xf32>
    %7 = arith.subf %5, %6 : vector<8x1xf32>
    %c0_4 = arith.constant 0 : index
    %c0_5 = arith.constant 0 : index
    %8 = vector.load %arg5[%c0_4, %c0_5] : memref<8x1xf32, #tpu.memory_space<vmem>>, vector<8x1xf32>
    %cst_6 = arith.constant 9.99999974E-6 : f32
    %9 = vector.broadcast %cst_6 : f32 to vector<8x1xf32>
    %10 = arith.addf %7, %9 : vector<8x1xf32>
    %11 = math.rsqrt %10 : vector<8x1xf32>
    %12 = arith.mulf %8, %11 : vector<8x1xf32>
    %c0_7 = arith.constant 0 : index
    %c0_8 = arith.constant 0 : index
    %13 = vector.load %arg6[%c0_7, %c0_8] : memref<8x1xf32, #tpu.memory_space<vmem>>, vector<8x1xf32>
    %14 = arith.mulf %2, %12 : vector<8x1xf32>
    %15 = arith.subf %13, %14 : vector<8x1xf32>
    %c0_9 = arith.constant 0 : index
    %c0_10 = arith.constant 0 : index
    %16 = vector.load %arg2[%c0_9, %c0_10] : memref<8x128xbf16, #tpu.memory_space<vmem>>, vector<8x128xbf16>
    %17 = arith.extf %16 : vector<8x128xbf16> to vector<8x128xf32>
    %18 = vector.broadcast %12 : vector<8x1xf32> to vector<8x128xf32>
    %19 = arith.mulf %17, %18 : vector<8x128xf32>
    %20 = vector.broadcast %15 : vector<8x1xf32> to vector<8x128xf32>
    %21 = arith.addf %19, %20 : vector<8x128xf32>
    %cst_11 = arith.constant 0.000000e+00 : f32
    %22 = vector.broadcast %cst_11 : f32 to vector<8x128xf32>
    %23 = arith.cmpf oge, %21, %22 : vector<8x128xf32>
    %cst_12 = arith.constant 2.000000e-01 : f32
    %24 = vector.broadcast %cst_12 : f32 to vector<8x128xf32>
    %25 = arith.mulf %24, %21 : vector<8x128xf32>
    %26 = arith.select %23, %21, %25 : vector<8x128xi1>, vector<8x128xf32>
    %27 = arith.truncf %26 : vector<8x128xf32> to vector<8x128xbf16>
    %c0_13 = arith.constant 0 : index
    %c0_14 = arith.constant 0 : index
    %28 = vector.load %arg7[%c0_13, %c0_14] : memref<8x128xbf16, #tpu.memory_space<vmem>>, vector<8x128xbf16>
    tpu.vector_store %arg7[%c0_13, %c0_14], %27 {strides = array<i32>} : memref<8x128xbf16, #tpu.memory_space<vmem>>, vector<8x128xbf16>,
    return
  }
  func.func @transform_0(%arg0: i32, %arg1: i32) -> (i32, i32) {
    %c0_i32 = arith.constant 0 : i32
    return %arg0, %arg1 : i32, i32
  }
  func.func @transform_1(%arg0: i32, %arg1: i32) -> (i32, i32) {
    %c0_i32 = arith.constant 0 : i32
    %c0_i32_0 = arith.constant 0 : i32
    return %arg0, %c0_i32 : i32, i32
  }
  func.func @transform_2(%arg0: i32, %arg1: i32) -> (i32, i32) {
    %c0_i32 = arith.constant 0 : i32
    %c0_i32_0 = arith.constant 0 : i32
    return %arg0, %c0_i32 : i32, i32
  }
  func.func @transform_3(%arg0: i32, %arg1: i32) -> (i32, i32) {
    %c0_i32 = arith.constant 0 : i32
    %c0_i32_0 = arith.constant 0 : i32
    return %arg0, %c0_i32 : i32, i32
  }
  func.func @transform_4(%arg0: i32, %arg1: i32) -> (i32, i32) {
    %c0_i32 = arith.constant 0 : i32
    %c0_i32_0 = arith.constant 0 : i32
    return %arg0, %c0_i32 : i32, i32
  }
  func.func @transform_5(%arg0: i32, %arg1: i32) -> (i32, i32) {
    %c0_i32 = arith.constant 0 : i32
    return %arg0, %arg1 : i32, i32
  }
}

module attributes {stable_mosaic.version = 11 : i64} {
  func.func @_conv_stats_kernel(%arg0: i32, %arg1: i32, %arg2: memref<16x128xbf16, #tpu.memory_space<vmem>>, %arg3: memref<128x128xbf16, #tpu.memory_space<vmem>>, %arg4: memref<16x128xbf16, #tpu.memory_space<vmem>>, %arg5: memref<16x1xf32, #tpu.memory_space<vmem>>, %arg6: memref<16x1xf32, #tpu.memory_space<vmem>>) attributes {dimension_semantics = [#tpu.dimension_semantics<parallel>, #tpu.dimension_semantics<arbitrary>], iteration_bounds = array<i64: 1, 1>, scalar_prefetch = 0 : i64, scratch_operands = 0 : i64, tpu.core_type = #tpu.core_type<tc>, window_params = [{transform_indices = @transform_0, window_bounds = array<i64: 16, 128>}, {transform_indices = @transform_1, window_bounds = array<i64: 128, 128>}, {transform_indices = @transform_2, window_bounds = array<i64: 16, 128>}, {transform_indices = @transform_3, window_bounds = array<i64: 16, 1>}, {transform_indices = @transform_4, window_bounds = array<i64: 16, 1>}]} {
    %c0_i32 = arith.constant 0 : i32
    %0 = arith.cmpi eq, %arg1, %c0_i32 : i32
    %1 = arith.extui %0 : i1 to i32
    %c0_i32_0 = arith.constant 0 : i32
    %2 = arith.cmpi ne, %1, %c0_i32_0 : i32
    scf.if %2 {
      %cst_16 = arith.constant 0.000000e+00 : f32
      %19 = vector.broadcast %cst_16 : f32 to vector<16x1xf32>
      %c0_17 = arith.constant 0 : index
      %c0_18 = arith.constant 0 : index
      %20 = vector.load %arg5[%c0_17, %c0_18] : memref<16x1xf32, #tpu.memory_space<vmem>>, vector<16x1xf32>
      tpu.vector_store %arg5[%c0_17, %c0_18], %19 {strides = array<i32>} : memref<16x1xf32, #tpu.memory_space<vmem>>, vector<16x1xf32>,
      %cst_19 = arith.constant 0.000000e+00 : f32
      %21 = vector.broadcast %cst_19 : f32 to vector<16x1xf32>
      %c0_20 = arith.constant 0 : index
      %c0_21 = arith.constant 0 : index
      %22 = vector.load %arg6[%c0_20, %c0_21] : memref<16x1xf32, #tpu.memory_space<vmem>>, vector<16x1xf32>
      tpu.vector_store %arg6[%c0_20, %c0_21], %21 {strides = array<i32>} : memref<16x1xf32, #tpu.memory_space<vmem>>, vector<16x1xf32>,
    } else {
    }
    %c0 = arith.constant 0 : index
    %c0_1 = arith.constant 0 : index
    %3 = vector.load %arg2[%c0, %c0_1] : memref<16x128xbf16, #tpu.memory_space<vmem>>, vector<16x128xbf16>
    %c0_2 = arith.constant 0 : index
    %c0_3 = arith.constant 0 : index
    %4 = vector.load %arg3[%c0_2, %c0_3] : memref<128x128xbf16, #tpu.memory_space<vmem>>, vector<128x128xbf16>
    %cst = arith.constant dense<0.000000e+00> : vector<16x128xf32>
    %5 = tpu.matmul %3, %4, %cst {dimension_numbers = #tpu.dot_dimension_numbers<[1], [0], [0], [1], [0, 0, 1, 1], [], []>} : vector<16x128xbf16>, vector<128x128xbf16>, vector<16x128xf32> -> vector<16x128xf32>
    %6 = arith.truncf %5 : vector<16x128xf32> to vector<16x128xbf16>
    %c0_4 = arith.constant 0 : index
    %c0_5 = arith.constant 0 : index
    %7 = vector.load %arg4[%c0_4, %c0_5] : memref<16x128xbf16, #tpu.memory_space<vmem>>, vector<16x128xbf16>
    tpu.vector_store %arg4[%c0_4, %c0_5], %6 {strides = array<i32>} : memref<16x128xbf16, #tpu.memory_space<vmem>>, vector<16x128xbf16>,
    %c0_6 = arith.constant 0 : index
    %c0_7 = arith.constant 0 : index
    %8 = vector.load %arg5[%c0_6, %c0_7] : memref<16x1xf32, #tpu.memory_space<vmem>>, vector<16x1xf32>
    %cst_8 = arith.constant dense<0.000000e+00> : vector<16xf32>
    %9 = vector.multi_reduction <add>, %5, %cst_8 [1] : vector<16x128xf32> to vector<16xf32>
    %10 = vector.shape_cast %9 : vector<16xf32> to vector<16x1xf32>
    %11 = arith.addf %8, %10 : vector<16x1xf32>
    %c0_9 = arith.constant 0 : index
    %c0_10 = arith.constant 0 : index
    %12 = vector.load %arg5[%c0_9, %c0_10] : memref<16x1xf32, #tpu.memory_space<vmem>>, vector<16x1xf32>
    tpu.vector_store %arg5[%c0_9, %c0_10], %11 {strides = array<i32>} : memref<16x1xf32, #tpu.memory_space<vmem>>, vector<16x1xf32>,
    %c0_11 = arith.constant 0 : index
    %c0_12 = arith.constant 0 : index
    %13 = vector.load %arg6[%c0_11, %c0_12] : memref<16x1xf32, #tpu.memory_space<vmem>>, vector<16x1xf32>
    %14 = arith.mulf %5, %5 : vector<16x128xf32>
    %cst_13 = arith.constant dense<0.000000e+00> : vector<16xf32>
    %15 = vector.multi_reduction <add>, %14, %cst_13 [1] : vector<16x128xf32> to vector<16xf32>
    %16 = vector.shape_cast %15 : vector<16xf32> to vector<16x1xf32>
    %17 = arith.addf %13, %16 : vector<16x1xf32>
    %c0_14 = arith.constant 0 : index
    %c0_15 = arith.constant 0 : index
    %18 = vector.load %arg6[%c0_14, %c0_15] : memref<16x1xf32, #tpu.memory_space<vmem>>, vector<16x1xf32>
    tpu.vector_store %arg6[%c0_14, %c0_15], %17 {strides = array<i32>} : memref<16x1xf32, #tpu.memory_space<vmem>>, vector<16x1xf32>,
    return
  }
  func.func @transform_0(%arg0: i32, %arg1: i32) -> (i32, i32) {
    %c0_i32 = arith.constant 0 : i32
    %c0_i32_0 = arith.constant 0 : i32
    return %arg0, %c0_i32 : i32, i32
  }
  func.func @transform_1(%arg0: i32, %arg1: i32) -> (i32, i32) {
    %c0_i32 = arith.constant 0 : i32
    %c0_i32_0 = arith.constant 0 : i32
    return %c0_i32, %arg1 : i32, i32
  }
  func.func @transform_2(%arg0: i32, %arg1: i32) -> (i32, i32) {
    %c0_i32 = arith.constant 0 : i32
    return %arg0, %arg1 : i32, i32
  }
  func.func @transform_3(%arg0: i32, %arg1: i32) -> (i32, i32) {
    %c0_i32 = arith.constant 0 : i32
    %c0_i32_0 = arith.constant 0 : i32
    return %arg0, %c0_i32 : i32, i32
  }
  func.func @transform_4(%arg0: i32, %arg1: i32) -> (i32, i32) {
    %c0_i32 = arith.constant 0 : i32
    %c0_i32_0 = arith.constant 0 : i32
    return %arg0, %c0_i32 : i32, i32
  }
}

module attributes {stable_mosaic.version = 11 : i64} {
  func.func @_conv_stats_kernel(%arg0: i32, %arg1: i32, %arg2: memref<16x64xbf16, #tpu.memory_space<vmem>>, %arg3: memref<64x128xbf16, #tpu.memory_space<vmem>>, %arg4: memref<16x128xbf16, #tpu.memory_space<vmem>>, %arg5: memref<16x1xf32, #tpu.memory_space<vmem>>, %arg6: memref<16x1xf32, #tpu.memory_space<vmem>>) attributes {dimension_semantics = [#tpu.dimension_semantics<parallel>, #tpu.dimension_semantics<arbitrary>], iteration_bounds = array<i64: 1, 1>, scalar_prefetch = 0 : i64, scratch_operands = 0 : i64, tpu.core_type = #tpu.core_type<tc>, window_params = [{transform_indices = @transform_0, window_bounds = array<i64: 16, 64>}, {transform_indices = @transform_1, window_bounds = array<i64: 64, 128>}, {transform_indices = @transform_2, window_bounds = array<i64: 16, 128>}, {transform_indices = @transform_3, window_bounds = array<i64: 16, 1>}, {transform_indices = @transform_4, window_bounds = array<i64: 16, 1>}]} {
    %c0_i32 = arith.constant 0 : i32
    %0 = arith.cmpi eq, %arg1, %c0_i32 : i32
    %1 = arith.extui %0 : i1 to i32
    %c0_i32_0 = arith.constant 0 : i32
    %2 = arith.cmpi ne, %1, %c0_i32_0 : i32
    scf.if %2 {
      %cst_16 = arith.constant 0.000000e+00 : f32
      %19 = vector.broadcast %cst_16 : f32 to vector<16x1xf32>
      %c0_17 = arith.constant 0 : index
      %c0_18 = arith.constant 0 : index
      %20 = vector.load %arg5[%c0_17, %c0_18] : memref<16x1xf32, #tpu.memory_space<vmem>>, vector<16x1xf32>
      tpu.vector_store %arg5[%c0_17, %c0_18], %19 {strides = array<i32>} : memref<16x1xf32, #tpu.memory_space<vmem>>, vector<16x1xf32>,
      %cst_19 = arith.constant 0.000000e+00 : f32
      %21 = vector.broadcast %cst_19 : f32 to vector<16x1xf32>
      %c0_20 = arith.constant 0 : index
      %c0_21 = arith.constant 0 : index
      %22 = vector.load %arg6[%c0_20, %c0_21] : memref<16x1xf32, #tpu.memory_space<vmem>>, vector<16x1xf32>
      tpu.vector_store %arg6[%c0_20, %c0_21], %21 {strides = array<i32>} : memref<16x1xf32, #tpu.memory_space<vmem>>, vector<16x1xf32>,
    } else {
    }
    %c0 = arith.constant 0 : index
    %c0_1 = arith.constant 0 : index
    %3 = vector.load %arg2[%c0, %c0_1] : memref<16x64xbf16, #tpu.memory_space<vmem>>, vector<16x64xbf16>
    %c0_2 = arith.constant 0 : index
    %c0_3 = arith.constant 0 : index
    %4 = vector.load %arg3[%c0_2, %c0_3] : memref<64x128xbf16, #tpu.memory_space<vmem>>, vector<64x128xbf16>
    %cst = arith.constant dense<0.000000e+00> : vector<16x128xf32>
    %5 = tpu.matmul %3, %4, %cst {dimension_numbers = #tpu.dot_dimension_numbers<[1], [0], [0], [1], [0, 0, 1, 1], [], []>} : vector<16x64xbf16>, vector<64x128xbf16>, vector<16x128xf32> -> vector<16x128xf32>
    %6 = arith.truncf %5 : vector<16x128xf32> to vector<16x128xbf16>
    %c0_4 = arith.constant 0 : index
    %c0_5 = arith.constant 0 : index
    %7 = vector.load %arg4[%c0_4, %c0_5] : memref<16x128xbf16, #tpu.memory_space<vmem>>, vector<16x128xbf16>
    tpu.vector_store %arg4[%c0_4, %c0_5], %6 {strides = array<i32>} : memref<16x128xbf16, #tpu.memory_space<vmem>>, vector<16x128xbf16>,
    %c0_6 = arith.constant 0 : index
    %c0_7 = arith.constant 0 : index
    %8 = vector.load %arg5[%c0_6, %c0_7] : memref<16x1xf32, #tpu.memory_space<vmem>>, vector<16x1xf32>
    %cst_8 = arith.constant dense<0.000000e+00> : vector<16xf32>
    %9 = vector.multi_reduction <add>, %5, %cst_8 [1] : vector<16x128xf32> to vector<16xf32>
    %10 = vector.shape_cast %9 : vector<16xf32> to vector<16x1xf32>
    %11 = arith.addf %8, %10 : vector<16x1xf32>
    %c0_9 = arith.constant 0 : index
    %c0_10 = arith.constant 0 : index
    %12 = vector.load %arg5[%c0_9, %c0_10] : memref<16x1xf32, #tpu.memory_space<vmem>>, vector<16x1xf32>
    tpu.vector_store %arg5[%c0_9, %c0_10], %11 {strides = array<i32>} : memref<16x1xf32, #tpu.memory_space<vmem>>, vector<16x1xf32>,
    %c0_11 = arith.constant 0 : index
    %c0_12 = arith.constant 0 : index
    %13 = vector.load %arg6[%c0_11, %c0_12] : memref<16x1xf32, #tpu.memory_space<vmem>>, vector<16x1xf32>
    %14 = arith.mulf %5, %5 : vector<16x128xf32>
    %cst_13 = arith.constant dense<0.000000e+00> : vector<16xf32>
    %15 = vector.multi_reduction <add>, %14, %cst_13 [1] : vector<16x128xf32> to vector<16xf32>
    %16 = vector.shape_cast %15 : vector<16xf32> to vector<16x1xf32>
    %17 = arith.addf %13, %16 : vector<16x1xf32>
    %c0_14 = arith.constant 0 : index
    %c0_15 = arith.constant 0 : index
    %18 = vector.load %arg6[%c0_14, %c0_15] : memref<16x1xf32, #tpu.memory_space<vmem>>, vector<16x1xf32>
    tpu.vector_store %arg6[%c0_14, %c0_15], %17 {strides = array<i32>} : memref<16x1xf32, #tpu.memory_space<vmem>>, vector<16x1xf32>,
    return
  }
  func.func @transform_0(%arg0: i32, %arg1: i32) -> (i32, i32) {
    %c0_i32 = arith.constant 0 : i32
    %c0_i32_0 = arith.constant 0 : i32
    return %arg0, %c0_i32 : i32, i32
  }
  func.func @transform_1(%arg0: i32, %arg1: i32) -> (i32, i32) {
    %c0_i32 = arith.constant 0 : i32
    %c0_i32_0 = arith.constant 0 : i32
    return %c0_i32, %arg1 : i32, i32
  }
  func.func @transform_2(%arg0: i32, %arg1: i32) -> (i32, i32) {
    %c0_i32 = arith.constant 0 : i32
    return %arg0, %arg1 : i32, i32
  }
  func.func @transform_3(%arg0: i32, %arg1: i32) -> (i32, i32) {
    %c0_i32 = arith.constant 0 : i32
    %c0_i32_0 = arith.constant 0 : i32
    return %arg0, %c0_i32 : i32, i32
  }
  func.func @transform_4(%arg0: i32, %arg1: i32) -> (i32, i32) {
    %c0_i32 = arith.constant 0 : i32
    %c0_i32_0 = arith.constant 0 : i32
    return %arg0, %c0_i32 : i32, i32
  }
}

module attributes {stable_mosaic.version = 11 : i64} {
  func.func @kernel(%arg0: i32, %arg1: i32, %arg2: memref<16x128xbf16, #tpu.memory_space<vmem>>, %arg3: memref<16x1xf32, #tpu.memory_space<vmem>>, %arg4: memref<16x1xf32, #tpu.memory_space<vmem>>, %arg5: memref<16x1xf32, #tpu.memory_space<vmem>>, %arg6: memref<16x1xf32, #tpu.memory_space<vmem>>, %arg7: memref<16x128xbf16, #tpu.memory_space<vmem>>, %arg8: memref<16x1xf32, #tpu.memory_space<vmem>>, %arg9: memref<16x1xf32, #tpu.memory_space<vmem>>, %arg10: memref<16x1xf32, #tpu.memory_space<vmem>>, %arg11: memref<16x1xf32, #tpu.memory_space<vmem>>, %arg12: memref<16x128xf32, #tpu.memory_space<vmem>>) attributes {dimension_semantics = [#tpu.dimension_semantics<parallel>, #tpu.dimension_semantics<parallel>], iteration_bounds = array<i64: 1, 1>, scalar_prefetch = 0 : i64, scratch_operands = 0 : i64, tpu.core_type = #tpu.core_type<tc>, window_params = [{transform_indices = @transform_0, window_bounds = array<i64: 16, 128>}, {transform_indices = @transform_1, window_bounds = array<i64: 16, 1>}, {transform_indices = @transform_2, window_bounds = array<i64: 16, 1>}, {transform_indices = @transform_3, window_bounds = array<i64: 16, 1>}, {transform_indices = @transform_4, window_bounds = array<i64: 16, 1>}, {transform_indices = @transform_5, window_bounds = array<i64: 16, 128>}, {transform_indices = @transform_6, window_bounds = array<i64: 16, 1>}, {transform_indices = @transform_7, window_bounds = array<i64: 16, 1>}, {transform_indices = @transform_8, window_bounds = array<i64: 16, 1>}, {transform_indices = @transform_9, window_bounds = array<i64: 16, 1>}, {transform_indices = @transform_10, window_bounds = array<i64: 16, 128>}]} {
    %c0 = arith.constant 0 : index
    %c0_0 = arith.constant 0 : index
    %0 = vector.load %arg3[%c0, %c0_0] : memref<16x1xf32, #tpu.memory_space<vmem>>, vector<16x1xf32>
    %cst = arith.constant 3.125000e-02 : f32
    %1 = vector.broadcast %cst : f32 to vector<16x1xf32>
    %2 = arith.mulf %0, %1 : vector<16x1xf32>
    %c0_1 = arith.constant 0 : index
    %c0_2 = arith.constant 0 : index
    %3 = vector.load %arg4[%c0_1, %c0_2] : memref<16x1xf32, #tpu.memory_space<vmem>>, vector<16x1xf32>
    %cst_3 = arith.constant 3.125000e-02 : f32
    %4 = vector.broadcast %cst_3 : f32 to vector<16x1xf32>
    %5 = arith.mulf %3, %4 : vector<16x1xf32>
    %6 = arith.mulf %2, %2 : vector<16x1xf32>
    %7 = arith.subf %5, %6 : vector<16x1xf32>
    %c0_4 = arith.constant 0 : index
    %c0_5 = arith.constant 0 : index
    %8 = vector.load %arg5[%c0_4, %c0_5] : memref<16x1xf32, #tpu.memory_space<vmem>>, vector<16x1xf32>
    %cst_6 = arith.constant 9.99999974E-6 : f32
    %9 = vector.broadcast %cst_6 : f32 to vector<16x1xf32>
    %10 = arith.addf %7, %9 : vector<16x1xf32>
    %11 = math.rsqrt %10 : vector<16x1xf32>
    %12 = arith.mulf %8, %11 : vector<16x1xf32>
    %c0_7 = arith.constant 0 : index
    %c0_8 = arith.constant 0 : index
    %13 = vector.load %arg6[%c0_7, %c0_8] : memref<16x1xf32, #tpu.memory_space<vmem>>, vector<16x1xf32>
    %14 = arith.mulf %2, %12 : vector<16x1xf32>
    %15 = arith.subf %13, %14 : vector<16x1xf32>
    %c0_9 = arith.constant 0 : index
    %c0_10 = arith.constant 0 : index
    %16 = vector.load %arg2[%c0_9, %c0_10] : memref<16x128xbf16, #tpu.memory_space<vmem>>, vector<16x128xbf16>
    %17 = arith.extf %16 : vector<16x128xbf16> to vector<16x128xf32>
    %18 = vector.broadcast %12 : vector<16x1xf32> to vector<16x128xf32>
    %19 = arith.mulf %17, %18 : vector<16x128xf32>
    %20 = vector.broadcast %15 : vector<16x1xf32> to vector<16x128xf32>
    %21 = arith.addf %19, %20 : vector<16x128xf32>
    %c0_11 = arith.constant 0 : index
    %c0_12 = arith.constant 0 : index
    %22 = vector.load %arg8[%c0_11, %c0_12] : memref<16x1xf32, #tpu.memory_space<vmem>>, vector<16x1xf32>
    %cst_13 = arith.constant 3.125000e-02 : f32
    %23 = vector.broadcast %cst_13 : f32 to vector<16x1xf32>
    %24 = arith.mulf %22, %23 : vector<16x1xf32>
    %c0_14 = arith.constant 0 : index
    %c0_15 = arith.constant 0 : index
    %25 = vector.load %arg9[%c0_14, %c0_15] : memref<16x1xf32, #tpu.memory_space<vmem>>, vector<16x1xf32>
    %cst_16 = arith.constant 3.125000e-02 : f32
    %26 = vector.broadcast %cst_16 : f32 to vector<16x1xf32>
    %27 = arith.mulf %25, %26 : vector<16x1xf32>
    %28 = arith.mulf %24, %24 : vector<16x1xf32>
    %29 = arith.subf %27, %28 : vector<16x1xf32>
    %c0_17 = arith.constant 0 : index
    %c0_18 = arith.constant 0 : index
    %30 = vector.load %arg10[%c0_17, %c0_18] : memref<16x1xf32, #tpu.memory_space<vmem>>, vector<16x1xf32>
    %cst_19 = arith.constant 9.99999974E-6 : f32
    %31 = vector.broadcast %cst_19 : f32 to vector<16x1xf32>
    %32 = arith.addf %29, %31 : vector<16x1xf32>
    %33 = math.rsqrt %32 : vector<16x1xf32>
    %34 = arith.mulf %30, %33 : vector<16x1xf32>
    %c0_20 = arith.constant 0 : index
    %c0_21 = arith.constant 0 : index
    %35 = vector.load %arg11[%c0_20, %c0_21] : memref<16x1xf32, #tpu.memory_space<vmem>>, vector<16x1xf32>
    %36 = arith.mulf %24, %34 : vector<16x1xf32>
    %37 = arith.subf %35, %36 : vector<16x1xf32>
    %c0_22 = arith.constant 0 : index
    %c0_23 = arith.constant 0 : index
    %38 = vector.load %arg7[%c0_22, %c0_23] : memref<16x128xbf16, #tpu.memory_space<vmem>>, vector<16x128xbf16>
    %39 = arith.extf %38 : vector<16x128xbf16> to vector<16x128xf32>
    %40 = vector.broadcast %34 : vector<16x1xf32> to vector<16x128xf32>
    %41 = arith.mulf %39, %40 : vector<16x128xf32>
    %42 = vector.broadcast %37 : vector<16x1xf32> to vector<16x128xf32>
    %43 = arith.addf %41, %42 : vector<16x128xf32>
    %44 = arith.addf %21, %43 : vector<16x128xf32>
    %cst_24 = arith.constant 0.000000e+00 : f32
    %45 = vector.broadcast %cst_24 : f32 to vector<16x128xf32>
    %46 = arith.cmpf oge, %44, %45 : vector<16x128xf32>
    %cst_25 = arith.constant 2.000000e-01 : f32
    %47 = vector.broadcast %cst_25 : f32 to vector<16x128xf32>
    %48 = arith.mulf %47, %44 : vector<16x128xf32>
    %49 = arith.select %46, %44, %48 : vector<16x128xi1>, vector<16x128xf32>
    %c0_26 = arith.constant 0 : index
    %c0_27 = arith.constant 0 : index
    %50 = vector.load %arg12[%c0_26, %c0_27] : memref<16x128xf32, #tpu.memory_space<vmem>>, vector<16x128xf32>
    tpu.vector_store %arg12[%c0_26, %c0_27], %49 {strides = array<i32>} : memref<16x128xf32, #tpu.memory_space<vmem>>, vector<16x128xf32>,
    return
  }
  func.func @transform_0(%arg0: i32, %arg1: i32) -> (i32, i32) {
    %c0_i32 = arith.constant 0 : i32
    return %arg0, %arg1 : i32, i32
  }
  func.func @transform_1(%arg0: i32, %arg1: i32) -> (i32, i32) {
    %c0_i32 = arith.constant 0 : i32
    %c0_i32_0 = arith.constant 0 : i32
    return %arg0, %c0_i32 : i32, i32
  }
  func.func @transform_2(%arg0: i32, %arg1: i32) -> (i32, i32) {
    %c0_i32 = arith.constant 0 : i32
    %c0_i32_0 = arith.constant 0 : i32
    return %arg0, %c0_i32 : i32, i32
  }
  func.func @transform_3(%arg0: i32, %arg1: i32) -> (i32, i32) {
    %c0_i32 = arith.constant 0 : i32
    %c0_i32_0 = arith.constant 0 : i32
    return %arg0, %c0_i32 : i32, i32
  }
  func.func @transform_4(%arg0: i32, %arg1: i32) -> (i32, i32) {
    %c0_i32 = arith.constant 0 : i32
    %c0_i32_0 = arith.constant 0 : i32
    return %arg0, %c0_i32 : i32, i32
  }
  func.func @transform_5(%arg0: i32, %arg1: i32) -> (i32, i32) {
    %c0_i32 = arith.constant 0 : i32
    return %arg0, %arg1 : i32, i32
  }
  func.func @transform_6(%arg0: i32, %arg1: i32) -> (i32, i32) {
    %c0_i32 = arith.constant 0 : i32
    %c0_i32_0 = arith.constant 0 : i32
    return %arg0, %c0_i32 : i32, i32
  }
  func.func @transform_7(%arg0: i32, %arg1: i32) -> (i32, i32) {
    %c0_i32 = arith.constant 0 : i32
    %c0_i32_0 = arith.constant 0 : i32
    return %arg0, %c0_i32 : i32, i32
  }
  func.func @transform_8(%arg0: i32, %arg1: i32) -> (i32, i32) {
    %c0_i32 = arith.constant 0 : i32
    %c0_i32_0 = arith.constant 0 : i32
    return %arg0, %c0_i32 : i32, i32
  }
  func.func @transform_9(%arg0: i32, %arg1: i32) -> (i32, i32) {
    %c0_i32 = arith.constant 0 : i32
    %c0_i32_0 = arith.constant 0 : i32
    return %arg0, %c0_i32 : i32, i32
  }
  func.func @transform_10(%arg0: i32, %arg1: i32) -> (i32, i32) {
    %c0_i32 = arith.constant 0 : i32
    return %arg0, %arg1 : i32, i32
  }
}

</mosaic_0001>

<llo_original>
// kernel: res_block_forward.7
$region0: #{res_block_forward.7}
  #allocation0 [shape = 'u32[]', space=smem, size = 0x4, offset = 0x4, fixed_abs, tag = 'smem constant byte address 0x4 - core index']
  #allocation1 [shape = 'u32[72,128]{1,0:T(1,128)}', space=vmem, size = 0x9000, scoped, tag = 'internal scratch']
  %s0 = inlined_call_operand.vmem [shape: bf16[8,128], index: 0, kind: input, shape index: {}]
  %s1 = inlined_call_operand.vmem [shape: f32[8,1], index: 1, kind: input, shape index: {}]
  %s2 = inlined_call_operand.vmem [shape: f32[8,1], index: 2, kind: input, shape index: {}]
  %s3 = inlined_call_operand.vmem [shape: f32[8,1], index: 3, kind: input, shape index: {}]
  %s4 = inlined_call_operand.vmem [shape: f32[8,1], index: 4, kind: input, shape index: {}]
  %s5 = inlined_call_operand.vmem [shape: bf16[8,128], index: 5, kind: output, shape index: {}]
  %s6 = sld [smem:[#allocation0]]
  $region30: #{res_block_forward.7} parent=0
    _
  %s8 = ssub.s32 1, %s6
  %s9 = scalar_select 0, %s8, %s6
  // Predicated region
  $region2: #{res_block_forward.7} parent=0 // pred_check
    _
  $region3: #{res_block_forward.7} parent=0 // pred_check_branch
    %11 = sbr.rel (0) target = $region5
  $region4: #{res_block_forward.7} parent=0 // pred_region
    _
  $region5: #{res_block_forward.7} parent=0 // pred_fallthru
    _
  // Predicated region
  $region6: #{res_block_forward.7} parent=0 // pred_check
    _
  $region7: #{res_block_forward.7} parent=0 // pred_check_branch
    %13 = sbr.rel (0) target = $region9
  $region8: #{res_block_forward.7} parent=0 // pred_region
    _
  $region9: #{res_block_forward.7} parent=0 // pred_fallthru
    _
  // Predicated region
  $region10: #{res_block_forward.7} parent=0 // pred_check
    _
  $region11: #{res_block_forward.7} parent=0 // pred_check_branch
    %15 = sbr.rel (0) target = $region13
  $region12: #{res_block_forward.7} parent=0 // pred_region
    _
  $region13: #{res_block_forward.7} parent=0 // pred_fallthru
    _
  // Predicated region
  $region14: #{res_block_forward.7} parent=0 // pred_check
    _
  $region15: #{res_block_forward.7} parent=0 // pred_check_branch
    %17 = sbr.rel (0) target = $region17
  $region16: #{res_block_forward.7} parent=0 // pred_region
    _
  $region17: #{res_block_forward.7} parent=0 // pred_fallthru
    _
  // Predicated region
  $region18: #{res_block_forward.7} parent=0 // pred_check
    _
  $region19: #{res_block_forward.7} parent=0 // pred_check_branch
    %19 = sbr.rel (0) target = $region21
  $region20: #{res_block_forward.7} parent=0 // pred_region
    _
  $region21: #{res_block_forward.7} parent=0 // pred_fallthru
    _
  %v20 = vld [vmem:[%s1] sm:$0xff]
  %v21 = vmul.f32 %v20, 0.0078125
  %v22 = vld [vmem:[%s2] sm:$0xff]
  %v23 = vmul.f32 %v22, 0.0078125
  %v24 = vmul.f32 %v21, %v21
  %v25 = vsub.f32 %v23, %v24
  %v26 = vld [vmem:[%s3] sm:$0xff]
  %v27 = vadd.f32 %v25, 1e-05
  %v28 = vrsqrt.pop %v27
  %v29 = vmul.f32 %v28, %v27
  %v30 = vmul.f32 %v29, %v28
  %v31 = vmul.f32 0.5, %v30
  %v32 = vsub.f32 1.5, %v31
  %v33 = vmul.f32 %v28, %v32
  %vm34 = vweird.f32 %v27
  %vm35 = vweird.f32 %v28
  %vm36 = vmor %vm34, %vm35
  %v37 = vsel %vm36, %v28, %v33
  %v38 = vmul.f32 %v26, %v37
  %v39 = vld [vmem:[%s4] sm:$0xff]
  %v40 = vmul.f32 %v21, %v38
  %v41 = vsub.f32 %v39, %v40
  %v42 = vld [vmem:[%s0] sm:$0xf]
  %v43 = vunpack.c.l.bf16 %v42
  %45 = vset.pattern.permute.xlu0 0
  %46 = vperm.xlu0 %45, %v38
  %v47 = vpop.permute.xlu0 %46
  %v49 = vmul.f32 %v43, %v47
  %51 = vset.pattern.permute.xlu0 0
  %52 = vperm.xlu0 %51, %v41
  %v53 = vpop.permute.xlu0 %52
  %v55 = vadd.f32 %v49, %v53
  %vm56 = vcmp.ge.f32.partialorder %v55, 0.0
  %v57 = vmul.f32 %v55, 0.2
  %v58 = vsel %vm56, %v55, %v57
  %v59 = vpack.c.bf16 %v58, %v58
  %60 = vst [vmem:[%s5] sm:$0xf] %v59
  // Predicated region
  $region22: #{res_block_forward.7} parent=0 // pred_check
    _
  $region23: #{res_block_forward.7} parent=0 // pred_check_branch
    %62 = sbr.rel (0) target = $region25
  $region24: #{res_block_forward.7} parent=0 // pred_region
    _
  $region25: #{res_block_forward.7} parent=0 // pred_fallthru
    _
  // Predicated region
  $region26: #{res_block_forward.7} parent=0 // pred_check
    _
  $region27: #{res_block_forward.7} parent=0 // pred_check_branch
    %64 = sbr.rel (0) target = $region29
  $region28: #{res_block_forward.7} parent=0 // pred_region
    _
  $region29: #{res_block_forward.7} parent=0 // pred_fallthru
    _

// kernel: res_block_forward.6
$region0: #{res_block_forward.6}
  #allocation0 [shape = 'u32[]', space=smem, size = 0x4, offset = 0x4, fixed_abs, tag = 'smem constant byte address 0x4 - core index']
  #allocation1 [shape = 'u32[72,128]{1,0:T(1,128)}', space=vmem, size = 0x9000, scoped, tag = 'internal scratch']
  %s0 = inlined_call_operand.vmem [shape: bf16[8,64], index: 0, kind: input, shape index: {}]
  %s1 = inlined_call_operand.vmem [shape: bf16[64,128], index: 1, kind: input, shape index: {}]
  %s2 = inlined_call_operand.vmem [shape: bf16[8,128], index: 2, kind: output, shape index: {0}]
  %s3 = inlined_call_operand.vmem [shape: f32[8,1], index: 3, kind: output, shape index: {1}]
  %s4 = inlined_call_operand.vmem [shape: f32[8,1], index: 4, kind: output, shape index: {2}]
  %5 = xla_tuple %s2, %s3, %s4
  %s6 = sld [smem:[#allocation0]]
  $region38: #{res_block_forward.6} parent=0
    _
  %s8 = ssub.s32 1, %s6
  %s9 = scalar_select 0, %s8, %s6
  // Predicated region
  $region2: #{res_block_forward.6} parent=0 // pred_check
    _
  $region3: #{res_block_forward.6} parent=0 // pred_check_branch
    %11 = sbr.rel (0) target = $region5
  $region4: #{res_block_forward.6} parent=0 // pred_region
    _
  $region5: #{res_block_forward.6} parent=0 // pred_fallthru
    _
  // Predicated region
  $region6: #{res_block_forward.6} parent=0 // pred_check
    _
  $region7: #{res_block_forward.6} parent=0 // pred_check_branch
    %13 = sbr.rel (0) target = $region9
  $region8: #{res_block_forward.6} parent=0 // pred_region
    _
  $region9: #{res_block_forward.6} parent=0 // pred_fallthru
    _
  %p15 = scmp.eq.s32.totalorder 0, 0
  // Predicated region
  $region10: #{res_block_forward.6} parent=0 // pred_check
    %p16 = pneg %p15
  $region11: #{res_block_forward.6} parent=0 // pred_check_branch
    %18 = sbr.rel (%p16) target = $region13
  $region12: #{res_block_forward.6} parent=0 // pred_region
    %vm19 = vcmask 7168
    %20 = vst.msk [vmem:[%s3] sm:$0xff] %vm19, 0.0
    %21 = vst.msk [vmem:[%s4] sm:$0xff] %vm19, 0.0
  $region13: #{res_block_forward.6} parent=0 // pred_fallthru
    _
  %v22 = vld [vmem:[%s0] sm:$0xf]
  %v23 = vld [vmem:[%s1] sm:$0xf]
  %v24 = vld [vmem:[%s1 + $0x4] sm:$0xf]
  %v25 = vld [vmem:[%s1 + $0x8] sm:$0xf]
  %v26 = vld [vmem:[%s1 + $0xc] sm:$0xf]
  %v27 = vld [vmem:[%s1 + $0x10] sm:$0xf]
  %v28 = vld [vmem:[%s1 + $0x14] sm:$0xf]
  %v29 = vld [vmem:[%s1 + $0x18] sm:$0xf]
  %v30 = vld [vmem:[%s1 + $0x1c] sm:$0xf]
  %v39 = vunpack.c.l.b16 %v23
  %v40 = vunpack.c.l.b16 %v24
  %v41 = vunpack.c.l.b16 %v25
  %v42 = vunpack.c.l.b16 %v26
  %v43 = vunpack.c.l.b16 %v27
  %v44 = vunpack.c.l.b16 %v28
  %v45 = vunpack.c.l.b16 %v29
  %v46 = vunpack.c.l.b16 %v30
  %v47 = vpack.c.b16 %v40, %v39
  %v48 = vpack.c.b16 %v42, %v41
  %v49 = vpack.c.b16 %v44, %v43
  %v50 = vpack.c.b16 %v46, %v45
  %vm55 = vcmask 523264
  %v57 = vsel %vm55, %v22, 0
  %59 = vmatpush.bf16.msra.mxu0 0
  %60 = vmatpush.bf16.msra.mxu0 0
  %61 = vmatpush.bf16.msra.mxu0 0
  %62 = vmatpush.bf16.msra.mxu0 0
  %63 = vmatpush.bf16.msra.mxu0 %v50
  %64 = vmatpush.bf16.msra.mxu0 %v49
  %65 = vmatpush.bf16.msra.mxu0 %v48
  %66 = vmatpush.bf16.msra.mxu0 %v47
  %67 = vmatmul.bf16.gmra.mxu0 %v57
  %v68 = vpop.f32.mrf.mxu0
  %v69 = vadd.f32 0.0, %v68
  %v70 = vpop.f32.mrf.mxu0
  %71 = vdwg.mxu0
  %v72 = vpack.c.bf16 %v69, %v69
  %73 = vst [vmem:[%s2] sm:$0xf] %v72
  %v74 = vld [vmem:[%s3] sm:$0xff]
  %75 = vadd.xlane.f32.xlu0 %v69
  %v76 = vpop.xlane.xlu0 %75
  %v77 = vadd.f32 %v74, %v76
  %vm78 = vcmask 7168
  %79 = vst.msk [vmem:[%s3] sm:$0xff] %vm78, %v77
  %v80 = vld [vmem:[%s4] sm:$0xff]
  %v81 = vmul.f32 %v69, %v69
  %82 = vadd.xlane.f32.xlu0 %v81
  %v83 = vpop.xlane.xlu0 %82
  %v84 = vadd.f32 %v80, %v83
  %85 = vst.msk [vmem:[%s4] sm:$0xff] %vm78, %v84
  // Predicated region
  $region14: #{res_block_forward.6} parent=0 // pred_check
    _
  $region15: #{res_block_forward.6} parent=0 // pred_check_branch
    %87 = sbr.rel (0) target = $region17
  $region16: #{res_block_forward.6} parent=0 // pred_region
    _
  $region17: #{res_block_forward.6} parent=0 // pred_fallthru
    _
  // Predicated region
  $region18: #{res_block_forward.6} parent=0 // pred_check
    _
  $region19: #{res_block_forward.6} parent=0 // pred_check_branch
    %89 = sbr.rel (0) target = $region21
  $region20: #{res_block_forward.6} parent=0 // pred_region
    _
  $region21: #{res_block_forward.6} parent=0 // pred_fallthru
    _
  // Predicated region
  $region22: #{res_block_forward.6} parent=0 // pred_check
    _
  $region23: #{res_block_forward.6} parent=0 // pred_check_branch
    %91 = sbr.rel (0) target = $region25
  $region24: #{res_block_forward.6} parent=0 // pred_region
    _
  $region25: #{res_block_forward.6} parent=0 // pred_fallthru
    _
  // Predicated region
  $region26: #{res_block_forward.6} parent=0 // pred_check
    _
  $region27: #{res_block_forward.6} parent=0 // pred_check_branch
    %93 = sbr.rel (0) target = $region29
  $region28: #{res_block_forward.6} parent=0 // pred_region
    _
  $region29: #{res_block_forward.6} parent=0 // pred_fallthru
    _
  // Predicated region
  $region30: #{res_block_forward.6} parent=0 // pred_check
    _
  $region31: #{res_block_forward.6} parent=0 // pred_check_branch
    %95 = sbr.rel (0) target = $region33
  $region32: #{res_block_forward.6} parent=0 // pred_region
    _
  $region33: #{res_block_forward.6} parent=0 // pred_fallthru
    _
  // Predicated region
  $region34: #{res_block_forward.6} parent=0 // pred_check
    _
  $region35: #{res_block_forward.6} parent=0 // pred_check_branch
    %97 = sbr.rel (0) target = $region37
  $region36: #{res_block_forward.6} parent=0 // pred_region
    _
  $region37: #{res_block_forward.6} parent=0 // pred_fallthru
    _

// kernel: res_block_forward.8
$region0: #{res_block_forward.8}
  #allocation0 [shape = 'u32[]', space=smem, size = 0x4, offset = 0x4, fixed_abs, tag = 'smem constant byte address 0x4 - core index']
  #allocation1 [shape = 'u32[72,128]{1,0:T(1,128)}', space=vmem, size = 0x9000, scoped, tag = 'internal scratch']
  %s0 = inlined_call_operand.vmem [shape: bf16[16,128], index: 0, kind: input, shape index: {}]
  %s1 = inlined_call_operand.vmem [shape: bf16[128,128], index: 1, kind: input, shape index: {}]
  %s2 = inlined_call_operand.vmem [shape: bf16[16,128], index: 2, kind: output, shape index: {0}]
  %s3 = inlined_call_operand.vmem [shape: f32[16,1], index: 3, kind: output, shape index: {1}]
  %s4 = inlined_call_operand.vmem [shape: f32[16,1], index: 4, kind: output, shape index: {2}]
  %5 = xla_tuple %s2, %s3, %s4
  %s6 = sld [smem:[#allocation0]]
  $region38: #{res_block_forward.8} parent=0
    _
  %s8 = ssub.s32 1, %s6
  %s9 = scalar_select 0, %s8, %s6
  // Predicated region
  $region2: #{res_block_forward.8} parent=0 // pred_check
    _
  $region3: #{res_block_forward.8} parent=0 // pred_check_branch
    %11 = sbr.rel (0) target = $region5
  $region4: #{res_block_forward.8} parent=0 // pred_region
    _
  $region5: #{res_block_forward.8} parent=0 // pred_fallthru
    _
  // Predicated region
  $region6: #{res_block_forward.8} parent=0 // pred_check
    _
  $region7: #{res_block_forward.8} parent=0 // pred_check_branch
    %13 = sbr.rel (0) target = $region9
  $region8: #{res_block_forward.8} parent=0 // pred_region
    _
  $region9: #{res_block_forward.8} parent=0 // pred_fallthru
    _
  %p14 = scmp.eq.s32.totalorder 0, 0
  // Predicated region
  $region10: #{res_block_forward.8} parent=0 // pred_check
    %p15 = pneg %p14
  $region11: #{res_block_forward.8} parent=0 // pred_check_branch
    %17 = sbr.rel (%p15) target = $region13
  $region12: #{res_block_forward.8} parent=0 // pred_region
    %vm18 = vcmask 7168
    %19 = vst.msk [vmem:[%s3] sm:$0xff] %vm18, 0.0
    %20 = vst.msk [vmem:[%s3 + $0x8] sm:$0xff] %vm18, 0.0
    %21 = vst.msk [vmem:[%s4] sm:$0xff] %vm18, 0.0
    %22 = vst.msk [vmem:[%s4 + $0x8] sm:$0xff] %vm18, 0.0
  $region13: #{res_block_forward.8} parent=0 // pred_fallthru
    _
  %v23 = vld [vmem:[%s0] sm:$0xf]
  %v24 = vld [vmem:[%s0 + $0x4] sm:$0xf]
  %v25 = vld [vmem:[%s1] sm:$0xf]
  %v26 = vld [vmem:[%s1 + $0x4] sm:$0xf]
  %v27 = vld [vmem:[%s1 + $0x8] sm:$0xf]
  %v28 = vld [vmem:[%s1 + $0xc] sm:$0xf]
  %v29 = vld [vmem:[%s1 + $0x10] sm:$0xf]
  %v30 = vld [vmem:[%s1 + $0x14] sm:$0xf]
  %v31 = vld [vmem:[%s1 + $0x18] sm:$0xf]
  %v32 = vld [vmem:[%s1 + $0x1c] sm:$0xf]
  %v33 = vld [vmem:[%s1 + $0x20] sm:$0xf]
  %v34 = vld [vmem:[%s1 + $0x24] sm:$0xf]
  %v35 = vld [vmem:[%s1 + $0x28] sm:$0xf]
  %v36 = vld [vmem:[%s1 + $0x2c] sm:$0xf]
  %v37 = vld [vmem:[%s1 + $0x30] sm:$0xf]
  %v38 = vld [vmem:[%s1 + $0x34] sm:$0xf]
  %v39 = vld [vmem:[%s1 + $0x38] sm:$0xf]
  %v40 = vld [vmem:[%s1 + $0x3c] sm:$0xf]
  %v43 = vunpack.c.l.b16 %v23
  %v44 = vunpack.c.l.b16 %v24
  %v45 = vpack.c.b16 %v44, %v43
  %v63 = vunpack.c.l.b16 %v25
  %v64 = vunpack.c.l.b16 %v26
  %v65 = vunpack.c.l.b16 %v27
  %v66 = vunpack.c.l.b16 %v28
  %v67 = vunpack.c.l.b16 %v29
  %v68 = vunpack.c.l.b16 %v30
  %v69 = vunpack.c.l.b16 %v31
  %v70 = vunpack.c.l.b16 %v32
  %v71 = vunpack.c.l.b16 %v33
  %v72 = vunpack.c.l.b16 %v34
  %v73 = vunpack.c.l.b16 %v35
  %v74 = vunpack.c.l.b16 %v36
  %v75 = vunpack.c.l.b16 %v37
  %v76 = vunpack.c.l.b16 %v38
  %v77 = vunpack.c.l.b16 %v39
  %v78 = vunpack.c.l.b16 %v40
  %v79 = vpack.c.b16 %v64, %v63
  %v80 = vpack.c.b16 %v66, %v65
  %v81 = vpack.c.b16 %v68, %v67
  %v82 = vpack.c.b16 %v70, %v69
  %v83 = vpack.c.b16 %v72, %v71
  %v84 = vpack.c.b16 %v74, %v73
  %v85 = vpack.c.b16 %v76, %v75
  %v86 = vpack.c.b16 %v78, %v77
  %95 = vmatpush.bf16.msra.mxu0 %v86
  %96 = vmatpush.bf16.msra.mxu0 %v85
  %97 = vmatpush.bf16.msra.mxu0 %v84
  %98 = vmatpush.bf16.msra.mxu0 %v83
  %99 = vmatpush.bf16.msra.mxu0 %v82
  %100 = vmatpush.bf16.msra.mxu0 %v81
  %101 = vmatpush.bf16.msra.mxu0 %v80
  %102 = vmatpush.bf16.msra.mxu0 %v79
  %103 = vmatmul.bf16.gmra.mxu0 %v45
  %v104 = vpop.f32.mrf.mxu0
  %v105 = vadd.f32 0.0, %v104
  %v106 = vpop.f32.mrf.mxu0
  %v107 = vadd.f32 0.0, %v106
  %108 = vdwg.mxu0
  %v109 = vpack.c.bf16 %v105, %v105
  %v110 = vpack.c.bf16 %v107, %v107
  %111 = vst [vmem:[%s2] sm:$0xf] %v109
  %112 = vst [vmem:[%s2 + $0x4] sm:$0xf] %v110
  %v113 = vld [vmem:[%s3] sm:$0xff]
  %v114 = vld [vmem:[%s3 + $0x8] sm:$0xff]
  %115 = vadd.xlane.f32.xlu0 %v105
  %v116 = vpop.xlane.xlu0 %115
  %117 = vadd.xlane.f32.xlu0 %v107
  %v118 = vpop.xlane.xlu0 %117
  %v119 = vadd.f32 %v113, %v116
  %v120 = vadd.f32 %v114, %v118
  %vm121 = vcmask 7168
  %122 = vst.msk [vmem:[%s3] sm:$0xff] %vm121, %v119
  %123 = vst.msk [vmem:[%s3 + $0x8] sm:$0xff] %vm121, %v120
  %v124 = vld [vmem:[%s4] sm:$0xff]
  %v125 = vld [vmem:[%s4 + $0x8] sm:$0xff]
  %v126 = vmul.f32 %v105, %v105
  %v127 = vmul.f32 %v107, %v107
  %128 = vadd.xlane.f32.xlu0 %v126
  %v129 = vpop.xlane.xlu0 %128
  %130 = vadd.xlane.f32.xlu0 %v127
  %v131 = vpop.xlane.xlu0 %130
  %v132 = vadd.f32 %v124, %v129
  %v133 = vadd.f32 %v125, %v131
  %134 = vst.msk [vmem:[%s4] sm:$0xff] %vm121, %v132
  %135 = vst.msk [vmem:[%s4 + $0x8] sm:$0xff] %vm121, %v133
  // Predicated region
  $region14: #{res_block_forward.8} parent=0 // pred_check
    _
  $region15: #{res_block_forward.8} parent=0 // pred_check_branch
    %137 = sbr.rel (0) target = $region17
  $region16: #{res_block_forward.8} parent=0 // pred_region
    _
  $region17: #{res_block_forward.8} parent=0 // pred_fallthru
    _
  // Predicated region
  $region18: #{res_block_forward.8} parent=0 // pred_check
    _
  $region19: #{res_block_forward.8} parent=0 // pred_check_branch
    %139 = sbr.rel (0) target = $region21
  $region20: #{res_block_forward.8} parent=0 // pred_region
    _
  $region21: #{res_block_forward.8} parent=0 // pred_fallthru
    _
  // Predicated region
  $region22: #{res_block_forward.8} parent=0 // pred_check
    _
  $region23: #{res_block_forward.8} parent=0 // pred_check_branch
    %141 = sbr.rel (0) target = $region25
  $region24: #{res_block_forward.8} parent=0 // pred_region
    _
  $region25: #{res_block_forward.8} parent=0 // pred_fallthru
    _
  // Predicated region
  $region26: #{res_block_forward.8} parent=0 // pred_check
    _
  $region27: #{res_block_forward.8} parent=0 // pred_check_branch
    %143 = sbr.rel (0) target = $region29
  $region28: #{res_block_forward.8} parent=0 // pred_region
    _
  $region29: #{res_block_forward.8} parent=0 // pred_fallthru
    _
  // Predicated region
  $region30: #{res_block_forward.8} parent=0 // pred_check
    _
  $region31: #{res_block_forward.8} parent=0 // pred_check_branch
    %145 = sbr.rel (0) target = $region33
  $region32: #{res_block_forward.8} parent=0 // pred_region
    _
  $region33: #{res_block_forward.8} parent=0 // pred_fallthru
    _
  // Predicated region
  $region34: #{res_block_forward.8} parent=0 // pred_check
    _
  $region35: #{res_block_forward.8} parent=0 // pred_check_branch
    %147 = sbr.rel (0) target = $region37
  $region36: #{res_block_forward.8} parent=0 // pred_region
    _
  $region37: #{res_block_forward.8} parent=0 // pred_fallthru
    _

// kernel: res_block_forward.5
$region0: #{res_block_forward.5}
  #allocation0 [shape = 'u32[]', space=smem, size = 0x4, offset = 0x4, fixed_abs, tag = 'smem constant byte address 0x4 - core index']
  #allocation1 [shape = 'u32[72,128]{1,0:T(1,128)}', space=vmem, size = 0x9000, scoped, tag = 'internal scratch']
  %s0 = inlined_call_operand.vmem [shape: bf16[16,64], index: 0, kind: input, shape index: {}]
  %s1 = inlined_call_operand.vmem [shape: bf16[64,128], index: 1, kind: input, shape index: {}]
  %s2 = inlined_call_operand.vmem [shape: bf16[16,128], index: 2, kind: output, shape index: {0}]
  %s3 = inlined_call_operand.vmem [shape: f32[16,1], index: 3, kind: output, shape index: {1}]
  %s4 = inlined_call_operand.vmem [shape: f32[16,1], index: 4, kind: output, shape index: {2}]
  %5 = xla_tuple %s2, %s3, %s4
  %s6 = sld [smem:[#allocation0]]
  $region38: #{res_block_forward.5} parent=0
    _
  %s8 = ssub.s32 1, %s6
  %s9 = scalar_select 0, %s8, %s6
  // Predicated region
  $region2: #{res_block_forward.5} parent=0 // pred_check
    _
  $region3: #{res_block_forward.5} parent=0 // pred_check_branch
    %11 = sbr.rel (0) target = $region5
  $region4: #{res_block_forward.5} parent=0 // pred_region
    _
  $region5: #{res_block_forward.5} parent=0 // pred_fallthru
    _
  // Predicated region
  $region6: #{res_block_forward.5} parent=0 // pred_check
    _
  $region7: #{res_block_forward.5} parent=0 // pred_check_branch
    %13 = sbr.rel (0) target = $region9
  $region8: #{res_block_forward.5} parent=0 // pred_region
    _
  $region9: #{res_block_forward.5} parent=0 // pred_fallthru
    _
  %p15 = scmp.eq.s32.totalorder 0, 0
  // Predicated region
  $region10: #{res_block_forward.5} parent=0 // pred_check
    %p16 = pneg %p15
  $region11: #{res_block_forward.5} parent=0 // pred_check_branch
    %18 = sbr.rel (%p16) target = $region13
  $region12: #{res_block_forward.5} parent=0 // pred_region
    %vm19 = vcmask 7168
    %20 = vst.msk [vmem:[%s3] sm:$0xff] %vm19, 0.0
    %21 = vst.msk [vmem:[%s3 + $0x8] sm:$0xff] %vm19, 0.0
    %22 = vst.msk [vmem:[%s4] sm:$0xff] %vm19, 0.0
    %23 = vst.msk [vmem:[%s4 + $0x8] sm:$0xff] %vm19, 0.0
  $region13: #{res_block_forward.5} parent=0 // pred_fallthru
    _
  %v24 = vld [vmem:[%s0] sm:$0xf]
  %v25 = vld [vmem:[%s0 + $0x4] sm:$0xf]
  %v26 = vld [vmem:[%s1] sm:$0xf]
  %v27 = vld [vmem:[%s1 + $0x4] sm:$0xf]
  %v28 = vld [vmem:[%s1 + $0x8] sm:$0xf]
  %v29 = vld [vmem:[%s1 + $0xc] sm:$0xf]
  %v30 = vld [vmem:[%s1 + $0x10] sm:$0xf]
  %v31 = vld [vmem:[%s1 + $0x14] sm:$0xf]
  %v32 = vld [vmem:[%s1 + $0x18] sm:$0xf]
  %v33 = vld [vmem:[%s1 + $0x1c] sm:$0xf]
  %v36 = vunpack.c.l.b16 %v24
  %v37 = vunpack.c.l.b16 %v25
  %v38 = vpack.c.b16 %v37, %v36
  %v47 = vunpack.c.l.b16 %v26
  %v48 = vunpack.c.l.b16 %v27
  %v49 = vunpack.c.l.b16 %v28
  %v50 = vunpack.c.l.b16 %v29
  %v51 = vunpack.c.l.b16 %v30
  %v52 = vunpack.c.l.b16 %v31
  %v53 = vunpack.c.l.b16 %v32
  %v54 = vunpack.c.l.b16 %v33
  %v55 = vpack.c.b16 %v48, %v47
  %v56 = vpack.c.b16 %v50, %v49
  %v57 = vpack.c.b16 %v52, %v51
  %v58 = vpack.c.b16 %v54, %v53
  %vm63 = vcmask 523264
  %v65 = vsel %vm63, %v38, 0
  %67 = vmatpush.bf16.msra.mxu0 0
  %68 = vmatpush.bf16.msra.mxu0 0
  %69 = vmatpush.bf16.msra.mxu0 0
  %70 = vmatpush.bf16.msra.mxu0 0
  %71 = vmatpush.bf16.msra.mxu0 %v58
  %72 = vmatpush.bf16.msra.mxu0 %v57
  %73 = vmatpush.bf16.msra.mxu0 %v56
  %74 = vmatpush.bf16.msra.mxu0 %v55
  %75 = vmatmul.bf16.gmra.mxu0 %v65
  %v76 = vpop.f32.mrf.mxu0
  %v77 = vadd.f32 0.0, %v76
  %v78 = vpop.f32.mrf.mxu0
  %v79 = vadd.f32 0.0, %v78
  %80 = vdwg.mxu0
  %v81 = vpack.c.bf16 %v77, %v77
  %v82 = vpack.c.bf16 %v79, %v79
  %83 = vst [vmem:[%s2] sm:$0xf] %v81
  %84 = vst [vmem:[%s2 + $0x4] sm:$0xf] %v82
  %v85 = vld [vmem:[%s3] sm:$0xff]
  %v86 = vld [vmem:[%s3 + $0x8] sm:$0xff]
  %87 = vadd.xlane.f32.xlu0 %v77
  %v88 = vpop.xlane.xlu0 %87
  %89 = vadd.xlane.f32.xlu0 %v79
  %v90 = vpop.xlane.xlu0 %89
  %v91 = vadd.f32 %v85, %v88
  %v92 = vadd.f32 %v86, %v90
  %vm93 = vcmask 7168
  %94 = vst.msk [vmem:[%s3] sm:$0xff] %vm93, %v91
  %95 = vst.msk [vmem:[%s3 + $0x8] sm:$0xff] %vm93, %v92
  %v96 = vld [vmem:[%s4] sm:$0xff]
  %v97 = vld [vmem:[%s4 + $0x8] sm:$0xff]
  %v98 = vmul.f32 %v77, %v77
  %v99 = vmul.f32 %v79, %v79
  %100 = vadd.xlane.f32.xlu0 %v98
  %v101 = vpop.xlane.xlu0 %100
  %102 = vadd.xlane.f32.xlu0 %v99
  %v103 = vpop.xlane.xlu0 %102
  %v104 = vadd.f32 %v96, %v101
  %v105 = vadd.f32 %v97, %v103
  %106 = vst.msk [vmem:[%s4] sm:$0xff] %vm93, %v104
  %107 = vst.msk [vmem:[%s4 + $0x8] sm:$0xff] %vm93, %v105
  // Predicated region
  $region14: #{res_block_forward.5} parent=0 // pred_check
    _
  $region15: #{res_block_forward.5} parent=0 // pred_check_branch
    %109 = sbr.rel (0) target = $region17
  $region16: #{res_block_forward.5} parent=0 // pred_region
    _
  $region17: #{res_block_forward.5} parent=0 // pred_fallthru
    _
  // Predicated region
  $region18: #{res_block_forward.5} parent=0 // pred_check
    _
  $region19: #{res_block_forward.5} parent=0 // pred_check_branch
    %111 = sbr.rel (0) target = $region21
  $region20: #{res_block_forward.5} parent=0 // pred_region
    _
  $region21: #{res_block_forward.5} parent=0 // pred_fallthru
    _
  // Predicated region
  $region22: #{res_block_forward.5} parent=0 // pred_check
    _
  $region23: #{res_block_forward.5} parent=0 // pred_check_branch
    %113 = sbr.rel (0) target = $region25
  $region24: #{res_block_forward.5} parent=0 // pred_region
    _
  $region25: #{res_block_forward.5} parent=0 // pred_fallthru
    _
  // Predicated region
  $region26: #{res_block_forward.5} parent=0 // pred_check
    _
  $region27: #{res_block_forward.5} parent=0 // pred_check_branch
    %115 = sbr.rel (0) target = $region29
  $region28: #{res_block_forward.5} parent=0 // pred_region
    _
  $region29: #{res_block_forward.5} parent=0 // pred_fallthru
    _
  // Predicated region
  $region30: #{res_block_forward.5} parent=0 // pred_check
    _
  $region31: #{res_block_forward.5} parent=0 // pred_check_branch
    %117 = sbr.rel (0) target = $region33
  $region32: #{res_block_forward.5} parent=0 // pred_region
    _
  $region33: #{res_block_forward.5} parent=0 // pred_fallthru
    _
  // Predicated region
  $region34: #{res_block_forward.5} parent=0 // pred_check
    _
  $region35: #{res_block_forward.5} parent=0 // pred_check_branch
    %119 = sbr.rel (0) target = $region37
  $region36: #{res_block_forward.5} parent=0 // pred_region
    _
  $region37: #{res_block_forward.5} parent=0 // pred_fallthru
    _

// kernel: res_block_forward.9
$region0: #{res_block_forward.9}
  #allocation0 [shape = 'u32[]', space=smem, size = 0x4, offset = 0x4, fixed_abs, tag = 'smem constant byte address 0x4 - core index']
  #allocation1 [shape = 'u32[72,128]{1,0:T(1,128)}', space=vmem, size = 0x9000, scoped, tag = 'internal scratch']
  %s0 = inlined_call_operand.vmem [shape: bf16[16,128], index: 0, kind: input, shape index: {}]
  %s1 = inlined_call_operand.vmem [shape: f32[16,1], index: 1, kind: input, shape index: {}]
  %s2 = inlined_call_operand.vmem [shape: f32[16,1], index: 2, kind: input, shape index: {}]
  %s3 = inlined_call_operand.vmem [shape: f32[16,1], index: 3, kind: input, shape index: {}]
  %s4 = inlined_call_operand.vmem [shape: f32[16,1], index: 4, kind: input, shape index: {}]
  %s5 = inlined_call_operand.vmem [shape: bf16[16,128], index: 5, kind: input, shape index: {}]
  %s6 = inlined_call_operand.vmem [shape: f32[16,1], index: 6, kind: input, shape index: {}]
  %s7 = inlined_call_operand.vmem [shape: f32[16,1], index: 7, kind: input, shape index: {}]
  %s8 = inlined_call_operand.vmem [shape: f32[16,1], index: 8, kind: input, shape index: {}]
  %s9 = inlined_call_operand.vmem [shape: f32[16,1], index: 9, kind: input, shape index: {}]
  %s10 = inlined_call_operand.vmem [shape: f32[16,128], index: 10, kind: output, shape index: {}]
  %s11 = sld [smem:[#allocation0]]
  $region50: #{res_block_forward.9} parent=0
    _
  %s13 = ssub.s32 1, %s11
  %s14 = scalar_select 0, %s13, %s11
  // Predicated region
  $region2: #{res_block_forward.9} parent=0 // pred_check
    _
  $region3: #{res_block_forward.9} parent=0 // pred_check_branch
    %16 = sbr.rel (0) target = $region5
  $region4: #{res_block_forward.9} parent=0 // pred_region
    _
  $region5: #{res_block_forward.9} parent=0 // pred_fallthru
    _
  // Predicated region
  $region6: #{res_block_forward.9} parent=0 // pred_check
    _
  $region7: #{res_block_forward.9} parent=0 // pred_check_branch
    %18 = sbr.rel (0) target = $region9
  $region8: #{res_block_forward.9} parent=0 // pred_region
    _
  $region9: #{res_block_forward.9} parent=0 // pred_fallthru
    _
  // Predicated region
  $region10: #{res_block_forward.9} parent=0 // pred_check
    _
  $region11: #{res_block_forward.9} parent=0 // pred_check_branch
    %20 = sbr.rel (0) target = $region13
  $region12: #{res_block_forward.9} parent=0 // pred_region
    _
  $region13: #{res_block_forward.9} parent=0 // pred_fallthru
    _
  // Predicated region
  $region14: #{res_block_forward.9} parent=0 // pred_check
    _
  $region15: #{res_block_forward.9} parent=0 // pred_check_branch
    %22 = sbr.rel (0) target = $region17
  $region16: #{res_block_forward.9} parent=0 // pred_region
    _
  $region17: #{res_block_forward.9} parent=0 // pred_fallthru
    _
  // Predicated region
  $region18: #{res_block_forward.9} parent=0 // pred_check
    _
  $region19: #{res_block_forward.9} parent=0 // pred_check_branch
    %24 = sbr.rel (0) target = $region21
  $region20: #{res_block_forward.9} parent=0 // pred_region
    _
  $region21: #{res_block_forward.9} parent=0 // pred_fallthru
    _
  // Predicated region
  $region22: #{res_block_forward.9} parent=0 // pred_check
    _
  $region23: #{res_block_forward.9} parent=0 // pred_check_branch
    %26 = sbr.rel (0) target = $region25
  $region24: #{res_block_forward.9} parent=0 // pred_region
    _
  $region25: #{res_block_forward.9} parent=0 // pred_fallthru
    _
  // Predicated region
  $region26: #{res_block_forward.9} parent=0 // pred_check
    _
  $region27: #{res_block_forward.9} parent=0 // pred_check_branch
    %28 = sbr.rel (0) target = $region29
  $region28: #{res_block_forward.9} parent=0 // pred_region
    _
  $region29: #{res_block_forward.9} parent=0 // pred_fallthru
    _
  // Predicated region
  $region30: #{res_block_forward.9} parent=0 // pred_check
    _
  $region31: #{res_block_forward.9} parent=0 // pred_check_branch
    %30 = sbr.rel (0) target = $region33
  $region32: #{res_block_forward.9} parent=0 // pred_region
    _
  $region33: #{res_block_forward.9} parent=0 // pred_fallthru
    _
  // Predicated region
  $region34: #{res_block_forward.9} parent=0 // pred_check
    _
  $region35: #{res_block_forward.9} parent=0 // pred_check_branch
    %32 = sbr.rel (0) target = $region37
  $region36: #{res_block_forward.9} parent=0 // pred_region
    _
  $region37: #{res_block_forward.9} parent=0 // pred_fallthru
    _
  // Predicated region
  $region38: #{res_block_forward.9} parent=0 // pred_check
    _
  $region39: #{res_block_forward.9} parent=0 // pred_check_branch
    %34 = sbr.rel (0) target = $region41
  $region40: #{res_block_forward.9} parent=0 // pred_region
    _
  $region41: #{res_block_forward.9} parent=0 // pred_fallthru
    _
  %v35 = vld [vmem:[%s1] sm:$0xff]
  %v36 = vld [vmem:[%s1 + $0x8] sm:$0xff]
  %v37 = vmul.f32 %v35, 0.03125
  %v38 = vmul.f32 %v36, 0.03125
  %v39 = vld [vmem:[%s2] sm:$0xff]
  %v40 = vld [vmem:[%s2 + $0x8] sm:$0xff]
  %v41 = vmul.f32 %v39, 0.03125
  %v42 = vmul.f32 %v40, 0.03125
  %v43 = vmul.f32 %v37, %v37
  %v44 = vmul.f32 %v38, %v38
  %v45 = vsub.f32 %v41, %v43
  %v46 = vsub.f32 %v42, %v44
  %v47 = vld [vmem:[%s3] sm:$0xff]
  %v48 = vld [vmem:[%s3 + $0x8] sm:$0xff]
  %v49 = vadd.f32 %v45, 1e-05
  %v50 = vadd.f32 %v46, 1e-05
  %v51 = vrsqrt.pop %v49
  %v52 = vmul.f32 %v51, %v49
  %v53 = vmul.f32 %v52, %v51
  %v54 = vmul.f32 0.5, %v53
  %v55 = vsub.f32 1.5, %v54
  %v56 = vmul.f32 %v51, %v55
  %vm57 = vweird.f32 %v49
  %vm58 = vweird.f32 %v51
  %vm59 = vmor %vm57, %vm58
  %v60 = vsel %vm59, %v51, %v56
  %v61 = vrsqrt.pop %v50
  %v62 = vmul.f32 %v61, %v50
  %v63 = vmul.f32 %v62, %v61
  %v64 = vmul.f32 0.5, %v63
  %v65 = vsub.f32 1.5, %v64
  %v66 = vmul.f32 %v61, %v65
  %vm67 = vweird.f32 %v50
  %vm68 = vweird.f32 %v61
  %vm69 = vmor %vm67, %vm68
  %v70 = vsel %vm69, %v61, %v66
  %v71 = vmul.f32 %v47, %v60
  %v72 = vmul.f32 %v48, %v70
  %v73 = vld [vmem:[%s4] sm:$0xff]
  %v74 = vld [vmem:[%s4 + $0x8] sm:$0xff]
  %v75 = vmul.f32 %v37, %v71
  %v76 = vmul.f32 %v38, %v72
  %v77 = vsub.f32 %v73, %v75
  %v78 = vsub.f32 %v74, %v76
  %v79 = vld [vmem:[%s0] sm:$0xf]
  %v80 = vld [vmem:[%s0 + $0x4] sm:$0xf]
  %v81 = vunpack.c.l.bf16 %v79
  %v82 = vunpack.c.l.bf16 %v80
  %84 = vset.pattern.permute.xlu0 0
  %85 = vperm.xlu0 %84, %v71
  %v86 = vpop.permute.xlu0 %85
  %89 = vset.pattern.permute.xlu0 0
  %90 = vperm.xlu0 %89, %v72
  %v91 = vpop.permute.xlu0 %90
  %v93 = vmul.f32 %v81, %v86
  %v94 = vmul.f32 %v82, %v91
  %96 = vset.pattern.permute.xlu0 0
  %97 = vperm.xlu0 %96, %v77
  %v98 = vpop.permute.xlu0 %97
  %101 = vset.pattern.permute.xlu0 0
  %102 = vperm.xlu0 %101, %v78
  %v103 = vpop.permute.xlu0 %102
  %v105 = vadd.f32 %v93, %v98
  %v106 = vadd.f32 %v94, %v103
  %v107 = vld [vmem:[%s6] sm:$0xff]
  %v108 = vld [vmem:[%s6 + $0x8] sm:$0xff]
  %v109 = vmul.f32 %v107, 0.03125
  %v110 = vmul.f32 %v108, 0.03125
  %v111 = vld [vmem:[%s7] sm:$0xff]
  %v112 = vld [vmem:[%s7 + $0x8] sm:$0xff]
  %v113 = vmul.f32 %v111, 0.03125
  %v114 = vmul.f32 %v112, 0.03125
  %v115 = vmul.f32 %v109, %v109
  %v116 = vmul.f32 %v110, %v110
  %v117 = vsub.f32 %v113, %v115
  %v118 = vsub.f32 %v114, %v116
  %v119 = vld [vmem:[%s8] sm:$0xff]
  %v120 = vld [vmem:[%s8 + $0x8] sm:$0xff]
  %v121 = vadd.f32 %v117, 1e-05
  %v122 = vadd.f32 %v118, 1e-05
  %v123 = vrsqrt.pop %v121
  %v124 = vmul.f32 %v123, %v121
  %v125 = vmul.f32 %v124, %v123
  %v126 = vmul.f32 0.5, %v125
  %v127 = vsub.f32 1.5, %v126
  %v128 = vmul.f32 %v123, %v127
  %vm129 = vweird.f32 %v121
  %vm130 = vweird.f32 %v123
  %vm131 = vmor %vm129, %vm130
  %v132 = vsel %vm131, %v123, %v128
  %v133 = vrsqrt.pop %v122
  %v134 = vmul.f32 %v133, %v122
  %v135 = vmul.f32 %v134, %v133
  %v136 = vmul.f32 0.5, %v135
  %v137 = vsub.f32 1.5, %v136
  %v138 = vmul.f32 %v133, %v137
  %vm139 = vweird.f32 %v122
  %vm140 = vweird.f32 %v133
  %vm141 = vmor %vm139, %vm140
  %v142 = vsel %vm141, %v133, %v138
  %v143 = vmul.f32 %v119, %v132
  %v144 = vmul.f32 %v120, %v142
  %v145 = vld [vmem:[%s9] sm:$0xff]
  %v146 = vld [vmem:[%s9 + $0x8] sm:$0xff]
  %v147 = vmul.f32 %v109, %v143
  %v148 = vmul.f32 %v110, %v144
  %v149 = vsub.f32 %v145, %v147
  %v150 = vsub.f32 %v146, %v148
  %v151 = vld [vmem:[%s5] sm:$0xf]
  %v152 = vld [vmem:[%s5 + $0x4] sm:$0xf]
  %v153 = vunpack.c.l.bf16 %v151
  %v154 = vunpack.c.l.bf16 %v152
  %156 = vset.pattern.permute.xlu0 0
  %157 = vperm.xlu0 %156, %v143
  %v158 = vpop.permute.xlu0 %157
  %161 = vset.pattern.permute.xlu0 0
  %162 = vperm.xlu0 %161, %v144
  %v163 = vpop.permute.xlu0 %162
  %v165 = vmul.f32 %v153, %v158
  %v166 = vmul.f32 %v154, %v163
  %168 = vset.pattern.permute.xlu0 0
  %169 = vperm.xlu0 %168, %v149
  %v170 = vpop.permute.xlu0 %169
  %173 = vset.pattern.permute.xlu0 0
  %174 = vperm.xlu0 %173, %v150
  %v175 = vpop.permute.xlu0 %174
  %v177 = vadd.f32 %v165, %v170
  %v178 = vadd.f32 %v166, %v175
  %v179 = vadd.f32 %v105, %v177
  %v180 = vadd.f32 %v106, %v178
  %vm181 = vcmp.ge.f32.partialorder %v179, 0.0
  %vm182 = vcmp.ge.f32.partialorder %v180, 0.0
  %v183 = vmul.f32 %v179, 0.2
  %v184 = vmul.f32 %v180, 0.2
  %v185 = vsel %vm181, %v179, %v183
  %v186 = vsel %vm182, %v180, %v184
  %187 = vst [vmem:[%s10] sm:$0xff] %v185
  %188 = vst [vmem:[%s10 + $0x8] sm:$0xff] %v186
  // Predicated region
  $region42: #{res_block_forward.9} parent=0 // pred_check
    _
  $region43: #{res_block_forward.9} parent=0 // pred_check_branch
    %190 = sbr.rel (0) target = $region45
  $region44: #{res_block_forward.9} parent=0 // pred_region
    _
  $region45: #{res_block_forward.9} parent=0 // pred_fallthru
    _
  // Predicated region
  $region46: #{res_block_forward.9} parent=0 // pred_check
    _
  $region47: #{res_block_forward.9} parent=0 // pred_check_branch
    %192 = sbr.rel (0) target = $region49
  $region48: #{res_block_forward.9} parent=0 // pred_region
    _
  $region49: #{res_block_forward.9} parent=0 // pred_fallthru
    _

</llo_original>
